<compile_context>
chip_gen: v5e
topology: v5e:2x2
jax: 0.10.0
libtpu: 0.0.40
codegen_flags: <defaults>
</compile_context>

<pallas_src>
import numpy as np
import jax
import jax.numpy as jnp
from jax.experimental import pallas as pl
from jax.experimental.pallas import tpu as pltpu


# ----------------------------------------------------------------------------
# Sub-pixel weight packing for ConvTranspose2d(k=3, stride=2, pad=1, out_pad=1)
# W4[di*2+dj, ic, (a*2+b)*Cout + oc] holds the flipped-kernel tap that maps
# input pixel x[i+di, j+dj] to output pixel y[2i+a, 2j+b].
# ----------------------------------------------------------------------------
def _build_subpixel_weights(wt):
    Cin, Cout, K, _ = wt.shape
    assert K == 3, "specialized to the deconvBlock default kernel_size=3"
    w4 = jnp.zeros((2, 2, Cin, 4 * Cout), wt.dtype)
    for a in range(2):
        for b in range(2):
            for ky in range(3):
                for kx in range(3):
                    if (a + ky - 1) % 2 != 0 or (b + kx - 1) % 2 != 0:
                        continue
                    di = (a + ky - 1) // 2
                    dj = (b + kx - 1) // 2
                    g = a * 2 + b
                    w4 = w4.at[di, dj, :, g * Cout:(g + 1) * Cout].set(
                        wt[:, :, 2 - ky, 2 - kx])
    return w4.reshape(4, Cin, 4 * Cout)


# ----------------------------------------------------------------------------
# Phase 1: per-image sub-pixel deconv matmul + per-channel sum / sum-of-squares
# ----------------------------------------------------------------------------
def _make_phase1_kernel(H, W):
    def kernel(xpad_ref, w4_ref, y4_ref, sum_ref, sumsq_ref):
        xp = xpad_ref[0]                              # (H+1, W+1, Cin) bf16
        cin = xp.shape[-1]
        cout4 = w4_ref.shape[-1]
        acc = jnp.zeros((H * W, cout4), jnp.float32)
        for di in range(2):
            for dj in range(2):
                xs = xp[di:di + H, dj:dj + W, :].reshape(H * W, cin)
                acc = acc + jnp.dot(xs, w4_ref[di * 2 + dj],
                                    preferred_element_type=jnp.float32)
        y4_ref[0] = acc
        sum_ref[0] = jnp.sum(acc, axis=0, keepdims=True)
        sumsq_ref[0] = jnp.sum(acc * acc, axis=0, keepdims=True)
    return kernel


# ----------------------------------------------------------------------------
# Phase 2: folded BatchNorm (y = acc*scale + shift) + ReLU, per image tile
# ----------------------------------------------------------------------------
def _bn_relu_kernel(y4_ref, scale_ref, shift_ref, out_ref):
    y = y4_ref[0] * scale_ref[...] + shift_ref[...]
    out_ref[0] = jnp.maximum(y, 0.0)


# ----------------------------------------------------------------------------
# deconvBlock forward (kernel_size=3, stride=2, padding=1, output_padding=1)
# ----------------------------------------------------------------------------
def deconv_block_forward(x_nchw, wt, bias, gamma, beta, eps=1e-5):
    del bias  # per-channel conv bias is exactly cancelled by BN mean subtraction
    N, Cin, H, W = x_nchw.shape
    Cout = wt.shape[1]
    Cout4 = 4 * Cout
    HW = H * W
    Ho, Wo = 2 * H, 2 * W

    x_nhwc = jnp.transpose(x_nchw, (0, 2, 3, 1))
    # one-row/col zero halo (bottom/right) covers the i+1 / j+1 taps + output_padding
    x_pad = jnp.pad(x_nhwc, ((0, 0), (0, 1), (0, 1), (0, 0))).astype(jnp.bfloat16)
    w4 = _build_subpixel_weights(wt).astype(jnp.bfloat16)

    cparams = pltpu.CompilerParams(
        dimension_semantics=("parallel",),          # batch axis: pipelined + megacore
        vmem_limit_bytes=32 * 1024 * 1024,          # cap; actual per-step usage is tiny
    )

    y4, csum, csumsq = pl.pallas_call(
        _make_phase1_kernel(H, W),
        grid=(N,),
        in_specs=[
            pl.BlockSpec((1, H + 1, W + 1, Cin), lambda n: (n, 0, 0, 0)),
            pl.BlockSpec((4, Cin, Cout4), lambda n: (0, 0, 0)),
        ],
        out_specs=(
            pl.BlockSpec((1, HW, Cout4), lambda n: (n, 0, 0)),
            pl.BlockSpec((1, 1, Cout4), lambda n: (n, 0, 0)),
            pl.BlockSpec((1, 1, Cout4), lambda n: (n, 0, 0)),
        ),
        out_shape=(
            jax.ShapeDtypeStruct((N, HW, Cout4), jnp.float32),
            jax.ShapeDtypeStruct((N, 1, Cout4), jnp.float32),
            jax.ShapeDtypeStruct((N, 1, Cout4), jnp.float32),
        ),
        compiler_params=cparams,
    )(x_pad, w4)

    # Tiny (Cout,)-sized BN statistics + affine folding in plain JAX.
    count = jnp.float32(N * Ho * Wo)
    s1 = jnp.sum(csum, axis=(0, 1)).reshape(4, Cout).sum(axis=0)
    s2 = jnp.sum(csumsq, axis=(0, 1)).reshape(4, Cout).sum(axis=0)
    mean = s1 / count
    var = jnp.maximum(s2 / count - mean * mean, 0.0)
    inv_std = jax.lax.rsqrt(var + eps)
    scale = gamma.astype(jnp.float32) * inv_std
    shift = beta.astype(jnp.float32) - mean * scale
    scale4 = jnp.tile(scale, 4).reshape(1, Cout4)
    shift4 = jnp.tile(shift, 4).reshape(1, Cout4)

    out4 = pl.pallas_call(
        _bn_relu_kernel,
        grid=(N,),
        in_specs=[
            pl.BlockSpec((1, HW, Cout4), lambda n: (n, 0, 0)),
            pl.BlockSpec((1, Cout4), lambda n: (0, 0)),
            pl.BlockSpec((1, Cout4), lambda n: (0, 0)),
        ],
        out_specs=pl.BlockSpec((1, HW, Cout4), lambda n: (n, 0, 0)),
        out_shape=jax.ShapeDtypeStruct((N, HW, Cout4), jnp.float32),
        compiler_params=cparams,
    )(y4, scale4, shift4)

    # depth-to-space: (N, H*W, 2*2*Cout) -> (N, Ho, Wo, Cout) -> NCHW
    out = out4.reshape(N, H, W, 2, 2, Cout)
    out = jnp.transpose(out, (0, 1, 3, 2, 4, 5)).reshape(N, Ho, Wo, Cout)
    return jnp.transpose(out, (0, 3, 1, 2))


# ----------------------------------------------------------------------------
# Pure-JAX f32 reference (includes the conv bias, which BN provably cancels)
# ----------------------------------------------------------------------------
def deconv_block_reference(x_nchw, wt, bias, gamma, beta, eps=1e-5):
    x_nhwc = jnp.transpose(x_nchw, (0, 2, 3, 1))
    w_eff = jnp.transpose(wt[:, :, ::-1, ::-1], (2, 3, 0, 1))   # (K,K,Cin,Cout)
    conv = jax.lax.conv_general_dilated(
        x_nhwc, w_eff, window_strides=(1, 1),
        padding=[(1, 2), (1, 2)],                    # K-1-p=1 lo, K-1-p+op=2 hi
        lhs_dilation=(2, 2),
        dimension_numbers=("NHWC", "HWIO", "NHWC"))
    conv = conv + bias.reshape(1, 1, 1, -1)
    mean = jnp.mean(conv, axis=(0, 1, 2), keepdims=True)
    var = jnp.mean((conv - mean) ** 2, axis=(0, 1, 2), keepdims=True)
    y = (conv - mean) * jax.lax.rsqrt(var + eps)
    y = y * gamma.reshape(1, 1, 1, -1) + beta.reshape(1, 1, 1, -1)
    y = jnp.maximum(y, 0.0)
    return jnp.transpose(y, (0, 3, 1, 2))


if __name__ == "__main__":
    # Small shapes consistent with the module: batch=2, in_ch=4, out_ch=8, 16x16.
    N, Cin, Cout, H, W = 2, 4, 8, 16, 16

    key = jax.random.PRNGKey(0)
    kx, kw, kb, kg, kbt = jax.random.split(key, 5)

    x = jax.random.normal(kx, (N, Cin, H, W), dtype=jnp.float32)
    # ConvTranspose2d weight shape: (in_channels, out_channels, kH, kW)
    wt = jax.random.normal(kw, (Cin, Cout, 3, 3), dtype=jnp.float32) * 0.1
    bias = jax.random.normal(kb, (Cout,), dtype=jnp.float32) * 0.1
    gamma = 1.0 + 0.1 * jax.random.normal(kg, (Cout,), dtype=jnp.float32)
    beta = 0.1 * jax.random.normal(kbt, (Cout,), dtype=jnp.float32)

    out = jax.block_until_ready(deconv_block_forward(x, wt, bias, gamma, beta))
    ref = jax.block_until_ready(deconv_block_reference(x, wt, bias, gamma, beta))

    assert out.shape == (N, Cout, 2 * H, 2 * W), out.shape
    # bf16 MXU inputs (f32 accumulation) vs. f32 reference -> loose-ish tolerance.
    np.testing.assert_allclose(np.asarray(out), np.asarray(ref), rtol=2e-2, atol=2e-2)
    print("KERNEL_OK")
</pallas_src>

<mosaic_0001>
module attributes {stable_mosaic.version = 11 : i64} {
  func.func @kernel(%arg0: i32, %arg1: memref<1x17x17x4xbf16, #tpu.memory_space<vmem>>, %arg2: memref<4x4x32xbf16, #tpu.memory_space<vmem>>, %arg3: memref<1x256x32xf32, #tpu.memory_space<vmem>>, %arg4: memref<1x1x32xf32, #tpu.memory_space<vmem>>, %arg5: memref<1x1x32xf32, #tpu.memory_space<vmem>>) attributes {dimension_semantics = [#tpu.dimension_semantics<parallel>], iteration_bounds = array<i64: 2>, scalar_prefetch = 0 : i64, scratch_operands = 0 : i64, tpu.core_type = #tpu.core_type<tc>, window_params = [{transform_indices = @transform_0, window_bounds = array<i64: 1, 17, 17, 4>}, {pipeline_mode = #tpu.pipeline_mode<synchronous>, transform_indices = @transform_1, window_bounds = array<i64: 4, 4, 32>}, {transform_indices = @transform_2, window_bounds = array<i64: 1, 256, 32>}, {transform_indices = @transform_3, window_bounds = array<i64: 1, 1, 32>}, {transform_indices = @transform_4, window_bounds = array<i64: 1, 1, 32>}]} {
    %c0 = arith.constant 0 : index
    %c0_0 = arith.constant 0 : index
    %c0_1 = arith.constant 0 : index
    %c0_2 = arith.constant 0 : index
    %0 = vector.load %arg1[%c0, %c0_0, %c0_1, %c0_2] : memref<1x17x17x4xbf16, #tpu.memory_space<vmem>>, vector<1x17x17x4xbf16>
    %1 = vector.shape_cast %0 : vector<1x17x17x4xbf16> to vector<17x17x4xbf16>
    %cst = arith.constant 0.000000e+00 : f32
    %2 = vector.broadcast %cst : f32 to vector<256x32xf32>
    %3 = vector.extract_strided_slice %1 {offsets = [0, 0, 0], sizes = [16, 16, 4], strides = [1, 1, 1]} : vector<17x17x4xbf16> to vector<16x16x4xbf16>
    %4 = vector.shape_cast %3 : vector<16x16x4xbf16> to vector<256x4xbf16>
    %c0_3 = arith.constant 0 : index
    %c0_4 = arith.constant 0 : index
    %c0_5 = arith.constant 0 : index
    %5 = vector.load %arg2[%c0_3, %c0_4, %c0_5] : memref<4x4x32xbf16, #tpu.memory_space<vmem>>, vector<1x4x32xbf16>
    %6 = vector.shape_cast %5 : vector<1x4x32xbf16> to vector<4x32xbf16>
    %cst_6 = arith.constant dense<0.000000e+00> : vector<256x32xf32>
    %7 = tpu.matmul %4, %6, %cst_6 {dimension_numbers = #tpu.dot_dimension_numbers<[1], [0], [0], [1], [0, 0, 1, 1], [], []>} : vector<256x4xbf16>, vector<4x32xbf16>, vector<256x32xf32> -> vector<256x32xf32>
    %8 = arith.addf %2, %7 : vector<256x32xf32>
    %9 = vector.extract_strided_slice %1 {offsets = [0, 1, 0], sizes = [16, 16, 4], strides = [1, 1, 1]} : vector<17x17x4xbf16> to vector<16x16x4xbf16>
    %10 = vector.shape_cast %9 : vector<16x16x4xbf16> to vector<256x4xbf16>
    %c1 = arith.constant 1 : index
    %c0_7 = arith.constant 0 : index
    %c0_8 = arith.constant 0 : index
    %11 = vector.load %arg2[%c1, %c0_7, %c0_8] : memref<4x4x32xbf16, #tpu.memory_space<vmem>>, vector<1x4x32xbf16>
    %12 = vector.shape_cast %11 : vector<1x4x32xbf16> to vector<4x32xbf16>
    %cst_9 = arith.constant dense<0.000000e+00> : vector<256x32xf32>
    %13 = tpu.matmul %10, %12, %cst_9 {dimension_numbers = #tpu.dot_dimension_numbers<[1], [0], [0], [1], [0, 0, 1, 1], [], []>} : vector<256x4xbf16>, vector<4x32xbf16>, vector<256x32xf32> -> vector<256x32xf32>
    %14 = arith.addf %8, %13 : vector<256x32xf32>
    %15 = vector.extract_strided_slice %1 {offsets = [1, 0, 0], sizes = [16, 16, 4], strides = [1, 1, 1]} : vector<17x17x4xbf16> to vector<16x16x4xbf16>
    %16 = vector.shape_cast %15 : vector<16x16x4xbf16> to vector<256x4xbf16>
    %c2 = arith.constant 2 : index
    %c0_10 = arith.constant 0 : index
    %c0_11 = arith.constant 0 : index
    %17 = vector.load %arg2[%c2, %c0_10, %c0_11] : memref<4x4x32xbf16, #tpu.memory_space<vmem>>, vector<1x4x32xbf16>
    %18 = vector.shape_cast %17 : vector<1x4x32xbf16> to vector<4x32xbf16>
    %cst_12 = arith.constant dense<0.000000e+00> : vector<256x32xf32>
    %19 = tpu.matmul %16, %18, %cst_12 {dimension_numbers = #tpu.dot_dimension_numbers<[1], [0], [0], [1], [0, 0, 1, 1], [], []>} : vector<256x4xbf16>, vector<4x32xbf16>, vector<256x32xf32> -> vector<256x32xf32>
    %20 = arith.addf %14, %19 : vector<256x32xf32>
    %21 = vector.extract_strided_slice %1 {offsets = [1, 1, 0], sizes = [16, 16, 4], strides = [1, 1, 1]} : vector<17x17x4xbf16> to vector<16x16x4xbf16>
    %22 = vector.shape_cast %21 : vector<16x16x4xbf16> to vector<256x4xbf16>
    %c3 = arith.constant 3 : index
    %c0_13 = arith.constant 0 : index
    %c0_14 = arith.constant 0 : index
    %23 = vector.load %arg2[%c3, %c0_13, %c0_14] : memref<4x4x32xbf16, #tpu.memory_space<vmem>>, vector<1x4x32xbf16>
    %24 = vector.shape_cast %23 : vector<1x4x32xbf16> to vector<4x32xbf16>
    %cst_15 = arith.constant dense<0.000000e+00> : vector<256x32xf32>
    %25 = tpu.matmul %22, %24, %cst_15 {dimension_numbers = #tpu.dot_dimension_numbers<[1], [0], [0], [1], [0, 0, 1, 1], [], []>} : vector<256x4xbf16>, vector<4x32xbf16>, vector<256x32xf32> -> vector<256x32xf32>
    %26 = arith.addf %20, %25 : vector<256x32xf32>
    %c0_16 = arith.constant 0 : index
    %c0_17 = arith.constant 0 : index
    %c0_18 = arith.constant 0 : index
    %27 = vector.load %arg3[%c0_16, %c0_17, %c0_18] : memref<1x256x32xf32, #tpu.memory_space<vmem>>, vector<1x256x32xf32>
    %28 = vector.shape_cast %27 : vector<1x256x32xf32> to vector<256x32xf32>
    %29 = vector.shape_cast %26 : vector<256x32xf32> to vector<1x256x32xf32>
    tpu.vector_store %arg3[%c0_16, %c0_17, %c0_18], %29 {strides = array<i32>} : memref<1x256x32xf32, #tpu.memory_space<vmem>>, vector<1x256x32xf32>,
    %cst_19 = arith.constant dense<0.000000e+00> : vector<32xf32>
    %30 = vector.multi_reduction <add>, %26, %cst_19 [0] : vector<256x32xf32> to vector<32xf32>
    %31 = vector.shape_cast %30 : vector<32xf32> to vector<1x32xf32>
    %c0_20 = arith.constant 0 : index
    %c0_21 = arith.constant 0 : index
    %c0_22 = arith.constant 0 : index
    %32 = vector.load %arg4[%c0_20, %c0_21, %c0_22] : memref<1x1x32xf32, #tpu.memory_space<vmem>>, vector<1x1x32xf32>
    %33 = vector.shape_cast %32 : vector<1x1x32xf32> to vector<1x32xf32>
    %34 = vector.shape_cast %31 : vector<1x32xf32> to vector<1x1x32xf32>
    tpu.vector_store %arg4[%c0_20, %c0_21, %c0_22], %34 {strides = array<i32>} : memref<1x1x32xf32, #tpu.memory_space<vmem>>, vector<1x1x32xf32>,
    %35 = arith.mulf %26, %26 : vector<256x32xf32>
    %cst_23 = arith.constant dense<0.000000e+00> : vector<32xf32>
    %36 = vector.multi_reduction <add>, %35, %cst_23 [0] : vector<256x32xf32> to vector<32xf32>
    %37 = vector.shape_cast %36 : vector<32xf32> to vector<1x32xf32>
    %c0_24 = arith.constant 0 : index
    %c0_25 = arith.constant 0 : index
    %c0_26 = arith.constant 0 : index
    %38 = vector.load %arg5[%c0_24, %c0_25, %c0_26] : memref<1x1x32xf32, #tpu.memory_space<vmem>>, vector<1x1x32xf32>
    %39 = vector.shape_cast %38 : vector<1x1x32xf32> to vector<1x32xf32>
    %40 = vector.shape_cast %37 : vector<1x32xf32> to vector<1x1x32xf32>
    tpu.vector_store %arg5[%c0_24, %c0_25, %c0_26], %40 {strides = array<i32>} : memref<1x1x32xf32, #tpu.memory_space<vmem>>, vector<1x1x32xf32>,
    return
  }
  func.func @transform_0(%arg0: i32) -> (i32, i32, i32, i32) {
    %c0_i32 = arith.constant 0 : i32
    %c0_i32_0 = arith.constant 0 : i32
    %c0_i32_1 = arith.constant 0 : i32
    %c0_i32_2 = arith.constant 0 : i32
    return %arg0, %c0_i32, %c0_i32_0, %c0_i32_1 : i32, i32, i32, i32
  }
  func.func @transform_1(%arg0: i32) -> (i32, i32, i32) {
    %c0_i32 = arith.constant 0 : i32
    %c0_i32_0 = arith.constant 0 : i32
    %c0_i32_1 = arith.constant 0 : i32
    %c0_i32_2 = arith.constant 0 : i32
    return %c0_i32, %c0_i32_0, %c0_i32_1 : i32, i32, i32
  }
  func.func @transform_2(%arg0: i32) -> (i32, i32, i32) {
    %c0_i32 = arith.constant 0 : i32
    %c0_i32_0 = arith.constant 0 : i32
    %c0_i32_1 = arith.constant 0 : i32
    return %arg0, %c0_i32, %c0_i32_0 : i32, i32, i32
  }
  func.func @transform_3(%arg0: i32) -> (i32, i32, i32) {
    %c0_i32 = arith.constant 0 : i32
    %c0_i32_0 = arith.constant 0 : i32
    %c0_i32_1 = arith.constant 0 : i32
    return %arg0, %c0_i32, %c0_i32_0 : i32, i32, i32
  }
  func.func @transform_4(%arg0: i32) -> (i32, i32, i32) {
    %c0_i32 = arith.constant 0 : i32
    %c0_i32_0 = arith.constant 0 : i32
    %c0_i32_1 = arith.constant 0 : i32
    return %arg0, %c0_i32, %c0_i32_0 : i32, i32, i32
  }
}

</mosaic_0001>

<llo_original>
// kernel: tpu_custom_call.1
$region0: #{tpu_custom_call.1}
  #allocation0 [shape = 'u32[]', space=smem, size = 0x4, offset = 0x4, fixed_abs, tag = 'smem constant byte address 0x4 - core index']
  #allocation1 [shape = 'u32[72,128]{1,0:T(1,128)}', space=vmem, size = 0x9000, scoped, tag = 'internal scratch']
  %s0 = inlined_call_operand.vmem [shape: bf16[2,17,17,4], index: 0, kind: input, shape index: {}]
  %s1 = inlined_call_operand.vmem [shape: bf16[4,4,32], index: 1, kind: input, shape index: {}]
  %s2 = inlined_call_operand.vmem [shape: f32[2,256,32], index: 2, kind: output, shape index: {0}]
  %s3 = inlined_call_operand.hbm [shape: f32[2,1,32], index: 3, kind: output, shape index: {1}]
  %s4 = inlined_call_operand.hbm [shape: f32[2,1,32], index: 4, kind: output, shape index: {2}]
  %5 = xla_tuple %s2, %s3, %s4
  %s6 = sld [smem:[#allocation0]]
  $region57: #{tpu_custom_call.1} parent=0
    _
  %s8 = ssub.s32 1, %s6
  %s9 = scalar_select 0, %s8, %s6
  $region1: #{tpu_custom_call.1} parent=0
    #allocation2 [shape = 'u8[1024]{0}', space=vmem, size = 0x400, scoped, tag = 'output window, operand 1']
    #allocation3 [shape = 's32[2]{0}', space=sflag, size = 0x8, scoped, tag = 'scoped memory for tpu_custom_call.1']
    #allocation4 [shape = 'u8[1024]{0}', space=vmem, size = 0x400, scoped, tag = 'output window, operand 2']
    #allocation5 [shape = 's32[2]{0}', space=sflag, size = 0x8, scoped, tag = 'scoped memory for tpu_custom_call.1']
    %10 = vsyncpa [#allocation3], 0
    %s11 = scalar_lea.sflag [#allocation3], 1
    %12 = vsyncpa %s11, 0
    %13 = vsyncpa [#allocation5], 0
    %s14 = scalar_lea.sflag [#allocation5], 1
    %15 = vsyncpa %s14, 0
    loop: start=0, step=1, limit=4
    $region2: #{tpu_custom_call.1} parent=1 // loop_pre_header
      _
    $region3: #{tpu_custom_call.1} parent=1 // loop_header
      %s17 = sphi 0, %s21
      %p18 = scmp.ge.s32.totalorder %s17, 4
      %s27 = sphi 0, %s29
      %s30 = sphi 0, %s27
      %s31 = sphi 0, %s30
      %s47 = sphi 0, %s31
      %s51 = sphi 0, %s51
      %s53 = sphi 0, %s51
      %s54 = sphi 0, %s53
      %s68 = sphi 0, %s54
      %s74 = sphi 0, %s76
      %s77 = sphi 0, %s74
      %s78 = sphi 0, %s77
      %s94 = sphi 0, %s78
      %s100 = sphi 0, %s102
      %s103 = sphi 0, %s100
      %s104 = sphi 0, %s103
      %s120 = sphi 0, %s104
      %s126 = sphi 0, %s128
      %s129 = sphi 0, %s126
      %s130 = sphi 0, %s129
      %s146 = sphi 0, %s130
    $region4: #{tpu_custom_call.1} parent=1 // loop_header_branch
      %20 = sbr.rel (%p18) target = $region8
    $region5: #{tpu_custom_call.1} parent=1 // loop_body
      %s22 = ssub.s32 %s17, 1
      %s23 = ssub.s32 %s17, 2
      %s24 = sadd.s32 %s17, 1
      %s25 = ssub.s32 %s17, %s24
      %p26 = scmp.eq.s32.totalorder %s25, 0
      %s28 = sadd.s32 %s27, 1
      %s29 = scalar_select %p26, %s27, %s28
      %p32 = pneg %p26
      %p33 = scmp.eq.s32.totalorder %s17, 1
      %p34 = por %p32, %p33
      %p35 = scmp.ne.s32.totalorder %s27, %s30
      %p36 = scmp.eq.s32.totalorder %s17, 0
      %p37 = por %p35, %p36
      %p38 = scmp.ne.s32.totalorder %s27, %s30
      %p39 = scmp.eq.s32.totalorder %s22, 1
      %p40 = por %p38, %p39
      %p41 = scmp.ne.s32.totalorder %s30, %s31
      %p42 = scmp.eq.s32.totalorder %s22, 0
      %p43 = por %p41, %p42
      %p44 = scmp.ne.s32.totalorder %s30, %s31
      %p45 = scmp.eq.s32.totalorder %s23, 1
      %p46 = por %p44, %p45
      %p48 = scmp.ne.s32.totalorder %s31, %s47
      %p49 = scmp.eq.s32.totalorder %s23, 0
      %p50 = por %p48, %p49
      %s52 = sadd.s32 %s51, 1
      %p55 = scmp.eq.s32.totalorder %s17, 1
      %p56 = scmp.ne.s32.totalorder %s51, %s53
      %p57 = scmp.eq.s32.totalorder %s17, 0
      %p58 = por %p56, %p57
      %p59 = scmp.ne.s32.totalorder %s51, %s53
      %p60 = scmp.eq.s32.totalorder %s22, 1
      %p61 = por %p59, %p60
      %p62 = scmp.ne.s32.totalorder %s53, %s54
      %p63 = scmp.eq.s32.totalorder %s22, 0
      %p64 = por %p62, %p63
      %p65 = scmp.ne.s32.totalorder %s53, %s54
      %p66 = scmp.eq.s32.totalorder %s23, 1
      %p67 = por %p65, %p66
      %p69 = scmp.ne.s32.totalorder %s54, %s68
      %p70 = scmp.eq.s32.totalorder %s23, 0
      %p71 = por %p69, %p70
      %s72 = ssub.s32 %s17, %s24
      %p73 = scmp.eq.s32.totalorder %s72, 0
      %s75 = sadd.s32 %s74, 1
      %s76 = scalar_select %p73, %s74, %s75
      %p79 = pneg %p73
      %p80 = scmp.eq.s32.totalorder %s17, 1
      %p81 = por %p79, %p80
      %p82 = scmp.ne.s32.totalorder %s74, %s77
      %p83 = scmp.eq.s32.totalorder %s17, 0
      %p84 = por %p82, %p83
      %p85 = scmp.ne.s32.totalorder %s74, %s77
      %p86 = scmp.eq.s32.totalorder %s22, 1
      %p87 = por %p85, %p86
      %p88 = scmp.ne.s32.totalorder %s77, %s78
      %p89 = scmp.eq.s32.totalorder %s22, 0
      %p90 = por %p88, %p89
      %p91 = scmp.ne.s32.totalorder %s77, %s78
      %p92 = scmp.eq.s32.totalorder %s23, 1
      %p93 = por %p91, %p92
      %p95 = scmp.ne.s32.totalorder %s78, %s94
      %p96 = scmp.eq.s32.totalorder %s23, 0
      %p97 = por %p95, %p96
      %s98 = ssub.s32 %s17, %s24
      %p99 = scmp.eq.s32.totalorder %s98, 0
      %s101 = sadd.s32 %s100, 1
      %s102 = scalar_select %p99, %s100, %s101
      %p105 = pneg %p99
      %p106 = scmp.eq.s32.totalorder %s17, 1
      %p107 = por %p105, %p106
      %p108 = scmp.ne.s32.totalorder %s100, %s103
      %p109 = scmp.eq.s32.totalorder %s17, 0
      %p110 = por %p108, %p109
      %p111 = scmp.ne.s32.totalorder %s100, %s103
      %p112 = scmp.eq.s32.totalorder %s22, 1
      %p113 = por %p111, %p112
      %p114 = scmp.ne.s32.totalorder %s103, %s104
      %p115 = scmp.eq.s32.totalorder %s22, 0
      %p116 = por %p114, %p115
      %p117 = scmp.ne.s32.totalorder %s103, %s104
      %p118 = scmp.eq.s32.totalorder %s23, 1
      %p119 = por %p117, %p118
      %p121 = scmp.ne.s32.totalorder %s104, %s120
      %p122 = scmp.eq.s32.totalorder %s23, 0
      %p123 = por %p121, %p122
      %s124 = ssub.s32 %s17, %s24
      %p125 = scmp.eq.s32.totalorder %s124, 0
      %s127 = sadd.s32 %s126, 1
      %s128 = scalar_select %p125, %s126, %s127
      %p131 = pneg %p125
      %p132 = scmp.eq.s32.totalorder %s17, 1
      %p133 = por %p131, %p132
      %p134 = scmp.ne.s32.totalorder %s126, %s129
      %p135 = scmp.eq.s32.totalorder %s17, 0
      %p136 = por %p134, %p135
      %p137 = scmp.ne.s32.totalorder %s126, %s129
      %p138 = scmp.eq.s32.totalorder %s22, 1
      %p139 = por %p137, %p138
      %p140 = scmp.ne.s32.totalorder %s129, %s130
      %p141 = scmp.eq.s32.totalorder %s22, 0
      %p142 = por %p140, %p141
      %p143 = scmp.ne.s32.totalorder %s129, %s130
      %p144 = scmp.eq.s32.totalorder %s23, 1
      %p145 = por %p143, %p144
      %p147 = scmp.ne.s32.totalorder %s130, %s146
      %p148 = scmp.eq.s32.totalorder %s23, 0
      %p149 = por %p147, %p148
      %p150 = scmp.le.s32.totalorder 1, %s17
      %p151 = scmp.lt.s32.totalorder %s17, 3
      %p152 = pnand %p150, %p151
      %p153 = pneg %p152
      // Predicated region
      $region9: #{tpu_custom_call.1} parent=5 // pred_check
        _
      $region10: #{tpu_custom_call.1} parent=5 // pred_check_branch
        %155 = sbr.rel (%p152) target = $region12
      $region11: #{tpu_custom_call.1} parent=5 // pred_region
        %s156 = ssub.s32 %s17, 1
        // Predicated region
        $region13: #{tpu_custom_call.1} parent=11 // pred_check
          %p157 = pneg %p64
        $region14: #{tpu_custom_call.1} parent=11 // pred_check_branch
          %159 = sbr.rel (%p157) target = $region16
        $region15: #{tpu_custom_call.1} parent=11 // pred_region
          _
        $region16: #{tpu_custom_call.1} parent=11 // pred_fallthru
          _
      $region12: #{tpu_custom_call.1} parent=5 // pred_fallthru
        _
      %p160 = scmp.lt.s32.totalorder %s17, 2
      // Predicated region
      $region17: #{tpu_custom_call.1} parent=5 // pred_check
        %p161 = pneg %p160
      $region18: #{tpu_custom_call.1} parent=5 // pred_check_branch
        %163 = sbr.rel (%p161) target = $region20
      $region19: #{tpu_custom_call.1} parent=5 // pred_region
        // Predicated region
        $region21: #{tpu_custom_call.1} parent=19 // pred_check
          %p164 = pneg %p37
        $region22: #{tpu_custom_call.1} parent=19 // pred_check_branch
          %166 = sbr.rel (%p164) target = $region24
        $region23: #{tpu_custom_call.1} parent=19 // pred_region
          %p167 = scmp.lt.s32.totalorder %s17, 1
          %s168 = scalar_select %p167, %s17, 1
          %s169 = smul.addr %s168, 51
          %s170 = smul.addr %s169, 4
          %s171 = scalar_lea.vmem %s0, %s170
        $region24: #{tpu_custom_call.1} parent=19 // pred_fallthru
          _
      $region20: #{tpu_custom_call.1} parent=5 // pred_fallthru
        _
      %p172 = scmp.le.s32.totalorder 1, %s17
      %p173 = scmp.lt.s32.totalorder %s17, 3
      %p174 = pnand %p172, %p173
      %p175 = pneg %p174
      // Predicated region
      $region25: #{tpu_custom_call.1} parent=5 // pred_check
        _
      $region26: #{tpu_custom_call.1} parent=5 // pred_check_branch
        %177 = sbr.rel (%p174) target = $region28
      $region27: #{tpu_custom_call.1} parent=5 // pred_region
        %s178 = ssub.s32 %s17, 1
        %p179 = scmp.lt.s32.totalorder %s22, 1
        %s180 = scalar_select %p179, %s22, 1
        %s181 = smul.addr %s180, 51
        %s182 = smul.addr %s181, 4
        %s183 = scalar_lea.vmem %s0, %s182
        %p184 = pneg %p43
        %p185 = pneg %p40
        %p186 = pneg %p64
        %p187 = pneg %p61
        %p188 = pneg %p90
        %p189 = pneg %p87
        %p190 = scmp.lt.s32.totalorder %s22, 1
        %s191 = scalar_select %p190, %s22, 1
        %s192 = smul.addr %s191, 32
        %s193 = smul.addr %s192, 8
        %s194 = scalar_lea.vmem %s2, %s193
        %p195 = pneg %p116
        %p196 = pneg %p113
        %s197 = sand.u32 %s103, 1
        %s198 = scalar_lea.sflag [#allocation3], %s197
        %s199 = sand.u32 %s103, 1
        %s200 = scalar_lea.vmem [#allocation2], %s199
        %p201 = pneg %p142
        %p202 = pneg %p139
        %s203 = sand.u32 %s129, 1
        %s204 = scalar_lea.sflag [#allocation5], %s203
        %s205 = sand.u32 %s129, 1
        %s206 = scalar_lea.vmem [#allocation4], %s205
        %p207 = scmp.lt.s32.totalorder %s22, 1
        %s208 = scalar_select %p207, %s22, 1
        %s209 = smul.addr %s208, 51
        %s210 = smul.addr %s209, 4
        %s211 = scalar_lea.vmem %s0, %s210
        %p212 = scmp.lt.s32.totalorder %s22, 1
        %s213 = scalar_select %p212, %s22, 1
        %s214 = smul.addr %s213, 32
        %s215 = smul.addr %s214, 8
        %s216 = scalar_lea.vmem %s2, %s215
        %v218 = vld [vmem:[%s211] sm:$0xf]
        %v219 = vld [vmem:[%s211 + $0x4] sm:$0xf]
        %v220 = vld [vmem:[%s211 + $0x8] sm:$0x1]
        %v221 = vld [vmem:[%s211 + $0xc] sm:$0xf]
        %v222 = vld [vmem:[%s211 + $0x10] sm:$0xf]
        %v223 = vld [vmem:[%s211 + $0x14] sm:$0x1]
        %v224 = vld [vmem:[%s211 + $0x18] sm:$0xf]
        %v225 = vld [vmem:[%s211 + $0x1c] sm:$0xf]
        %v226 = vld [vmem:[%s211 + $0x20] sm:$0x1]
        %v227 = vld [vmem:[%s211 + $0x24] sm:$0xf]
        %v228 = vld [vmem:[%s211 + $0x28] sm:$0xf]
        %v229 = vld [vmem:[%s211 + $0x2c] sm:$0x1]
        %v230 = vld [vmem:[%s211 + $0x30] sm:$0xf]
        %v231 = vld [vmem:[%s211 + $0x34] sm:$0xf]
        %v232 = vld [vmem:[%s211 + $0x38] sm:$0x1]
        %v233 = vld [vmem:[%s211 + $0x3c] sm:$0xf]
        %v234 = vld [vmem:[%s211 + $0x40] sm:$0xf]
        %v235 = vld [vmem:[%s211 + $0x44] sm:$0x1]
        %v236 = vld [vmem:[%s211 + $0x48] sm:$0xf]
        %v237 = vld [vmem:[%s211 + $0x4c] sm:$0xf]
        %v238 = vld [vmem:[%s211 + $0x50] sm:$0x1]
        %v239 = vld [vmem:[%s211 + $0x54] sm:$0xf]
        %v240 = vld [vmem:[%s211 + $0x58] sm:$0xf]
        %v241 = vld [vmem:[%s211 + $0x5c] sm:$0x1]
        %v242 = vld [vmem:[%s211 + $0x60] sm:$0xf]
        %v243 = vld [vmem:[%s211 + $0x64] sm:$0xf]
        %v244 = vld [vmem:[%s211 + $0x68] sm:$0x1]
        %v245 = vld [vmem:[%s211 + $0x6c] sm:$0xf]
        %v246 = vld [vmem:[%s211 + $0x70] sm:$0xf]
        %v247 = vld [vmem:[%s211 + $0x74] sm:$0x1]
        %v248 = vld [vmem:[%s211 + $0x78] sm:$0xf]
        %v249 = vld [vmem:[%s211 + $0x7c] sm:$0xf]
        %v250 = vld [vmem:[%s211 + $0x80] sm:$0x1]
        %v251 = vld [vmem:[%s211 + $0x84] sm:$0xf]
        %v252 = vld [vmem:[%s211 + $0x88] sm:$0xf]
        %v253 = vld [vmem:[%s211 + $0x8c] sm:$0x1]
        %v254 = vld [vmem:[%s211 + $0x90] sm:$0xf]
        %v255 = vld [vmem:[%s211 + $0x94] sm:$0xf]
        %v256 = vld [vmem:[%s211 + $0x98] sm:$0x1]
        %v257 = vld [vmem:[%s211 + $0x9c] sm:$0xf]
        %v258 = vld [vmem:[%s211 + $0xa0] sm:$0xf]
        %v259 = vld [vmem:[%s211 + $0xa4] sm:$0x1]
        %v260 = vld [vmem:[%s211 + $0xa8] sm:$0xf]
        %v261 = vld [vmem:[%s211 + $0xac] sm:$0xf]
        %v262 = vld [vmem:[%s211 + $0xb0] sm:$0x1]
        %v263 = vld [vmem:[%s211 + $0xb4] sm:$0xf]
        %v264 = vld [vmem:[%s211 + $0xb8] sm:$0xf]
        %v265 = vld [vmem:[%s211 + $0xbc] sm:$0x1]
        %v266 = vld [vmem:[%s211 + $0xc0] sm:$0xf]
        %v267 = vld [vmem:[%s211 + $0xc4] sm:$0xf]
        %v268 = vld [vmem:[%s211 + $0xc8] sm:$0x1]
        %v269 = vld [vmem:[%s1] sm:$0x3]
        %vm270 = vsmask.f32 3328
        %vm271 = vsmask.f32 7440
        %vm272 = vmor %vm270, %vm271
        %v274 = vshrl.u32 %v218, 16
        %v276 = vrot.slane %v274, 4
        %v277 = vshll.u32 %v218, 16
        %v279 = vrot.slane %v277, 5
        %v280 = vor.u32 %v276, %v279
        %v281 = vrot.slane %v280, 4
        %v283 = vshll.u32 %v219, 16
        %v285 = vrot.slane %v283, 5
        %v286 = vsel %vm272, %v281, %v285
        %v287 = vshrl.u32 %v219, 16
        %v289 = vrot.slane %v287, 4
        %v290 = vor.u32 %v289, %v285
        %v291 = vrot.slane %v290, 4
        %v293 = vshll.u32 %v220, 16
        %v295 = vrot.slane %v293, 5
        %v296 = vsel %vm272, %v291, %v295
        %v298 = vshrl.u32 %v221, 16
        %v300 = vrot.slane %v298, 4
        %v301 = vshll.u32 %v221, 16
        %v303 = vrot.slane %v301, 5
        %v304 = vor.u32 %v300, %v303
        %v305 = vrot.slane %v304, 4
        %v307 = vshll.u32 %v222, 16
        %v309 = vrot.slane %v307, 5
        %v310 = vsel %vm272, %v305, %v309
        %v311 = vshrl.u32 %v222, 16
        %v313 = vrot.slane %v311, 4
        %v314 = vor.u32 %v313, %v309
        %v315 = vrot.slane %v314, 4
        %v317 = vshll.u32 %v223, 16
        %v319 = vrot.slane %v317, 5
        %v320 = vsel %vm272, %v315, %v319
        %v322 = vshrl.u32 %v224, 16
        %v324 = vrot.slane %v322, 4
        %v325 = vshll.u32 %v224, 16
        %v327 = vrot.slane %v325, 5
        %v328 = vor.u32 %v324, %v327
        %v329 = vrot.slane %v328, 4
        %v331 = vshll.u32 %v225, 16
        %v333 = vrot.slane %v331, 5
        %v334 = vsel %vm272, %v329, %v333
        %v335 = vshrl.u32 %v225, 16
        %v337 = vrot.slane %v335, 4
        %v338 = vor.u32 %v337, %v333
        %v339 = vrot.slane %v338, 4
        %v341 = vshll.u32 %v226, 16
        %v343 = vrot.slane %v341, 5
        %v344 = vsel %vm272, %v339, %v343
        %v346 = vshrl.u32 %v227, 16
        %v348 = vrot.slane %v346, 4
        %v349 = vshll.u32 %v227, 16
        %v351 = vrot.slane %v349, 5
        %v352 = vor.u32 %v348, %v351
        %v353 = vrot.slane %v352, 4
        %v355 = vshll.u32 %v228, 16
        %v357 = vrot.slane %v355, 5
        %v358 = vsel %vm272, %v353, %v357
        %v359 = vshrl.u32 %v228, 16
        %v361 = vrot.slane %v359, 4
        %v362 = vor.u32 %v361, %v357
        %v363 = vrot.slane %v362, 4
        %v365 = vshll.u32 %v229, 16
        %v367 = vrot.slane %v365, 5
        %v368 = vsel %vm272, %v363, %v367
        %v370 = vshrl.u32 %v230, 16
        %v372 = vrot.slane %v370, 4
        %v373 = vshll.u32 %v230, 16
        %v375 = vrot.slane %v373, 5
        %v376 = vor.u32 %v372, %v375
        %v377 = vrot.slane %v376, 4
        %v379 = vshll.u32 %v231, 16
        %v381 = vrot.slane %v379, 5
        %v382 = vsel %vm272, %v377, %v381
        %v383 = vshrl.u32 %v231, 16
        %v385 = vrot.slane %v383, 4
        %v386 = vor.u32 %v385, %v381
        %v387 = vrot.slane %v386, 4
        %v389 = vshll.u32 %v232, 16
        %v391 = vrot.slane %v389, 5
        %v392 = vsel %vm272, %v387, %v391
        %v394 = vshrl.u32 %v233, 16
        %v396 = vrot.slane %v394, 4
        %v397 = vshll.u32 %v233, 16
        %v399 = vrot.slane %v397, 5
        %v400 = vor.u32 %v396, %v399
        %v401 = vrot.slane %v400, 4
        %v403 = vshll.u32 %v234, 16
        %v405 = vrot.slane %v403, 5
        %v406 = vsel %vm272, %v401, %v405
        %v407 = vshrl.u32 %v234, 16
        %v409 = vrot.slane %v407, 4
        %v410 = vor.u32 %v409, %v405
        %v411 = vrot.slane %v410, 4
        %v413 = vshll.u32 %v235, 16
        %v415 = vrot.slane %v413, 5
        %v416 = vsel %vm272, %v411, %v415
        %v418 = vshrl.u32 %v236, 16
        %v420 = vrot.slane %v418, 4
        %v421 = vshll.u32 %v236, 16
        %v423 = vrot.slane %v421, 5
        %v424 = vor.u32 %v420, %v423
        %v425 = vrot.slane %v424, 4
        %v427 = vshll.u32 %v237, 16
        %v429 = vrot.slane %v427, 5
        %v430 = vsel %vm272, %v425, %v429
        %v431 = vshrl.u32 %v237, 16
        %v433 = vrot.slane %v431, 4
        %v434 = vor.u32 %v433, %v429
        %v435 = vrot.slane %v434, 4
        %v437 = vshll.u32 %v238, 16
        %v439 = vrot.slane %v437, 5
        %v440 = vsel %vm272, %v435, %v439
        %v442 = vshrl.u32 %v239, 16
        %v444 = vrot.slane %v442, 4
        %v445 = vshll.u32 %v239, 16
        %v447 = vrot.slane %v445, 5
        %v448 = vor.u32 %v444, %v447
        %v449 = vrot.slane %v448, 4
        %v451 = vshll.u32 %v240, 16
        %v453 = vrot.slane %v451, 5
        %v454 = vsel %vm272, %v449, %v453
        %v455 = vshrl.u32 %v240, 16
        %v457 = vrot.slane %v455, 4
        %v458 = vor.u32 %v457, %v453
        %v459 = vrot.slane %v458, 4
        %v461 = vshll.u32 %v241, 16
        %v463 = vrot.slane %v461, 5
        %v464 = vsel %vm272, %v459, %v463
        %v466 = vshrl.u32 %v242, 16
        %v468 = vrot.slane %v466, 4
        %v469 = vshll.u32 %v242, 16
        %v471 = vrot.slane %v469, 5
        %v472 = vor.u32 %v468, %v471
        %v473 = vrot.slane %v472, 4
        %v475 = vshll.u32 %v243, 16
        %v477 = vrot.slane %v475, 5
        %v478 = vsel %vm272, %v473, %v477
        %v479 = vshrl.u32 %v243, 16
        %v481 = vrot.slane %v479, 4
        %v482 = vor.u32 %v481, %v477
        %v483 = vrot.slane %v482, 4
        %v485 = vshll.u32 %v244, 16
        %v487 = vrot.slane %v485, 5
        %v488 = vsel %vm272, %v483, %v487
        %v490 = vshrl.u32 %v245, 16
        %v492 = vrot.slane %v490, 4
        %v493 = vshll.u32 %v245, 16
        %v495 = vrot.slane %v493, 5
        %v496 = vor.u32 %v492, %v495
        %v497 = vrot.slane %v496, 4
        %v499 = vshll.u32 %v246, 16
        %v501 = vrot.slane %v499, 5
        %v502 = vsel %vm272, %v497, %v501
        %v503 = vshrl.u32 %v246, 16
        %v505 = vrot.slane %v503, 4
        %v506 = vor.u32 %v505, %v501
        %v507 = vrot.slane %v506, 4
        %v509 = vshll.u32 %v247, 16
        %v511 = vrot.slane %v509, 5
        %v512 = vsel %vm272, %v507, %v511
        %v514 = vshrl.u32 %v248, 16
        %v516 = vrot.slane %v514, 4
        %v517 = vshll.u32 %v248, 16
        %v519 = vrot.slane %v517, 5
        %v520 = vor.u32 %v516, %v519
        %v521 = vrot.slane %v520, 4
        %v523 = vshll.u32 %v249, 16
        %v525 = vrot.slane %v523, 5
        %v526 = vsel %vm272, %v521, %v525
        %v527 = vshrl.u32 %v249, 16
        %v529 = vrot.slane %v527, 4
        %v530 = vor.u32 %v529, %v525
        %v531 = vrot.slane %v530, 4
        %v533 = vshll.u32 %v250, 16
        %v535 = vrot.slane %v533, 5
        %v536 = vsel %vm272, %v531, %v535
        %v538 = vshrl.u32 %v251, 16
        %v540 = vrot.slane %v538, 4
        %v541 = vshll.u32 %v251, 16
        %v543 = vrot.slane %v541, 5
        %v544 = vor.u32 %v540, %v543
        %v545 = vrot.slane %v544, 4
        %v547 = vshll.u32 %v252, 16
        %v549 = vrot.slane %v547, 5
        %v550 = vsel %vm272, %v545, %v549
        %v551 = vshrl.u32 %v252, 16
        %v553 = vrot.slane %v551, 4
        %v554 = vor.u32 %v553, %v549
        %v555 = vrot.slane %v554, 4
        %v557 = vshll.u32 %v253, 16
        %v559 = vrot.slane %v557, 5
        %v560 = vsel %vm272, %v555, %v559
        %v562 = vshrl.u32 %v254, 16
        %v564 = vrot.slane %v562, 4
        %v565 = vshll.u32 %v254, 16
        %v567 = vrot.slane %v565, 5
        %v568 = vor.u32 %v564, %v567
        %v569 = vrot.slane %v568, 4
        %v571 = vshll.u32 %v255, 16
        %v573 = vrot.slane %v571, 5
        %v574 = vsel %vm272, %v569, %v573
        %v575 = vshrl.u32 %v255, 16
        %v577 = vrot.slane %v575, 4
        %v578 = vor.u32 %v577, %v573
        %v579 = vrot.slane %v578, 4
        %v581 = vshll.u32 %v256, 16
        %v583 = vrot.slane %v581, 5
        %v584 = vsel %vm272, %v579, %v583
        %v586 = vshrl.u32 %v257, 16
        %v588 = vrot.slane %v586, 4
        %v589 = vshll.u32 %v257, 16
        %v591 = vrot.slane %v589, 5
        %v592 = vor.u32 %v588, %v591
        %v593 = vrot.slane %v592, 4
        %v595 = vshll.u32 %v258, 16
        %v597 = vrot.slane %v595, 5
        %v598 = vsel %vm272, %v593, %v597
        %v599 = vshrl.u32 %v258, 16
        %v601 = vrot.slane %v599, 4
        %v602 = vor.u32 %v601, %v597
        %v603 = vrot.slane %v602, 4
        %v605 = vshll.u32 %v259, 16
        %v607 = vrot.slane %v605, 5
        %v608 = vsel %vm272, %v603, %v607
        %v610 = vshrl.u32 %v260, 16
        %v612 = vrot.slane %v610, 4
        %v613 = vshll.u32 %v260, 16
        %v615 = vrot.slane %v613, 5
        %v616 = vor.u32 %v612, %v615
        %v617 = vrot.slane %v616, 4
        %v619 = vshll.u32 %v261, 16
        %v621 = vrot.slane %v619, 5
        %v622 = vsel %vm272, %v617, %v621
        %v623 = vshrl.u32 %v261, 16
        %v625 = vrot.slane %v623, 4
        %v626 = vor.u32 %v625, %v621
        %v627 = vrot.slane %v626, 4
        %v629 = vshll.u32 %v262, 16
        %v631 = vrot.slane %v629, 5
        %v632 = vsel %vm272, %v627, %v631
        %v634 = vshrl.u32 %v263, 16
        %v636 = vrot.slane %v634, 4
        %v637 = vshll.u32 %v263, 16
        %v639 = vrot.slane %v637, 5
        %v640 = vor.u32 %v636, %v639
        %v641 = vrot.slane %v640, 4
        %v643 = vshll.u32 %v264, 16
        %v645 = vrot.slane %v643, 5
        %v646 = vsel %vm272, %v641, %v645
        %v647 = vshrl.u32 %v264, 16
        %v649 = vrot.slane %v647, 4
        %v650 = vor.u32 %v649, %v645
        %v651 = vrot.slane %v650, 4
        %v653 = vshll.u32 %v265, 16
        %v655 = vrot.slane %v653, 5
        %v656 = vsel %vm272, %v651, %v655
        %s657 = scalar_lea.vmem %s1, 2
        %v658 = vld [vmem:[%s657] sm:$0x3]
        %v659 = vunpack.c.l.b16 %v286
        %v660 = vunpack.c.l.b16 %v296
        %v661 = vunpack.c.l.b16 %v310
        %v662 = vunpack.c.l.b16 %v320
        %v663 = vunpack.c.l.b16 %v334
        %v664 = vunpack.c.l.b16 %v344
        %v665 = vunpack.c.l.b16 %v358
        %v666 = vunpack.c.l.b16 %v368
        %v667 = vunpack.c.l.b16 %v382
        %v668 = vunpack.c.l.b16 %v392
        %v669 = vunpack.c.l.b16 %v406
        %v670 = vunpack.c.l.b16 %v416
        %v671 = vunpack.c.l.b16 %v430
        %v672 = vunpack.c.l.b16 %v440
        %v673 = vunpack.c.l.b16 %v454
        %v674 = vunpack.c.l.b16 %v464
        %v675 = vunpack.c.l.b16 %v478
        %v676 = vunpack.c.l.b16 %v488
        %v677 = vunpack.c.l.b16 %v502
        %v678 = vunpack.c.l.b16 %v512
        %v679 = vunpack.c.l.b16 %v526
        %v680 = vunpack.c.l.b16 %v536
        %v681 = vunpack.c.l.b16 %v550
        %v682 = vunpack.c.l.b16 %v560
        %v683 = vunpack.c.l.b16 %v574
        %v684 = vunpack.c.l.b16 %v584
        %v685 = vunpack.c.l.b16 %v598
        %v686 = vunpack.c.l.b16 %v608
        %v687 = vunpack.c.l.b16 %v622
        %v688 = vunpack.c.l.b16 %v632
        %v689 = vunpack.c.l.b16 %v646
        %v690 = vunpack.c.l.b16 %v656
        %v691 = vpack.c.b16 %v660, %v659
        %v692 = vpack.c.b16 %v662, %v661
        %v693 = vpack.c.b16 %v664, %v663
        %v694 = vpack.c.b16 %v666, %v665
        %v695 = vpack.c.b16 %v668, %v667
        %v696 = vpack.c.b16 %v670, %v669
        %v697 = vpack.c.b16 %v672, %v671
        %v698 = vpack.c.b16 %v674, %v673
        %v699 = vpack.c.b16 %v676, %v675
        %v700 = vpack.c.b16 %v678, %v677
        %v701 = vpack.c.b16 %v680, %v679
        %v702 = vpack.c.b16 %v682, %v681
        %v703 = vpack.c.b16 %v684, %v683
        %v704 = vpack.c.b16 %v686, %v685
        %v705 = vpack.c.b16 %v688, %v687
        %v706 = vpack.c.b16 %v690, %v689
        %vm707 = vcmask 31744
        %v709 = vsel %vm707, %v691, 0
        %v712 = vsel %vm707, %v692, 0
        %v715 = vsel %vm707, %v693, 0
        %v718 = vsel %vm707, %v694, 0
        %v721 = vsel %vm707, %v695, 0
        %v724 = vsel %vm707, %v696, 0
        %v727 = vsel %vm707, %v697, 0
        %v730 = vsel %vm707, %v698, 0
        %v733 = vsel %vm707, %v699, 0
        %v736 = vsel %vm707, %v700, 0
        %v739 = vsel %vm707, %v701, 0
        %v742 = vsel %vm707, %v702, 0
        %v745 = vsel %vm707, %v703, 0
        %v748 = vsel %vm707, %v704, 0
        %v751 = vsel %vm707, %v705, 0
        %v754 = vsel %vm707, %v706, 0
        %vm756 = vcmask 1041408
        %v758 = vsel %vm756, %v658, 0
        %760 = vmatpush.bf16.msra.mxu0 0
        %761 = vmatpush.bf16.msra.mxu0 0
        %762 = vmatpush.bf16.msra.mxu0 0
        %763 = vmatpush.bf16.msra.mxu0 0
        %764 = vmatpush.bf16.msra.mxu0 0
        %765 = vmatpush.bf16.msra.mxu0 0
        %766 = vmatpush.bf16.msra.mxu0 0
        %767 = vmatpush.bf16.msra.mxu0 %v758
        %768 = vmatmul.bf16.gmra.mxu0 %v709
        %v769 = vpop.f32.mrf.mxu0
        %v770 = vadd.f32 0.0, %v769
        %v771 = vpop.f32.mrf.mxu0
        %v772 = vadd.f32 0.0, %v771
        %773 = vmatmul.bf16.gmra.mxu0 %v712
        %v774 = vpop.f32.mrf.mxu0
        %v775 = vadd.f32 0.0, %v774
        %v776 = vpop.f32.mrf.mxu0
        %v777 = vadd.f32 0.0, %v776
        %778 = vmatmul.bf16.gmra.mxu0 %v715
        %v779 = vpop.f32.mrf.mxu0
        %v780 = vadd.f32 0.0, %v779
        %v781 = vpop.f32.mrf.mxu0
        %v782 = vadd.f32 0.0, %v781
        %783 = vmatmul.bf16.gmra.mxu0 %v718
        %v784 = vpop.f32.mrf.mxu0
        %v785 = vadd.f32 0.0, %v784
        %v786 = vpop.f32.mrf.mxu0
        %v787 = vadd.f32 0.0, %v786
        %788 = vmatmul.bf16.gmra.mxu0 %v721
        %v789 = vpop.f32.mrf.mxu0
        %v790 = vadd.f32 0.0, %v789
        %v791 = vpop.f32.mrf.mxu0
        %v792 = vadd.f32 0.0, %v791
        %793 = vmatmul.bf16.gmra.mxu0 %v724
        %v794 = vpop.f32.mrf.mxu0
        %v795 = vadd.f32 0.0, %v794
        %v796 = vpop.f32.mrf.mxu0
        %v797 = vadd.f32 0.0, %v796
        %798 = vmatmul.bf16.gmra.mxu0 %v727
        %v799 = vpop.f32.mrf.mxu0
        %v800 = vadd.f32 0.0, %v799
        %v801 = vpop.f32.mrf.mxu0
        %v802 = vadd.f32 0.0, %v801
        %803 = vmatmul.bf16.gmra.mxu0 %v730
        %v804 = vpop.f32.mrf.mxu0
        %v805 = vadd.f32 0.0, %v804
        %v806 = vpop.f32.mrf.mxu0
        %v807 = vadd.f32 0.0, %v806
        %808 = vmatmul.bf16.gmra.mxu0 %v733
        %v809 = vpop.f32.mrf.mxu0
        %v810 = vadd.f32 0.0, %v809
        %v811 = vpop.f32.mrf.mxu0
        %v812 = vadd.f32 0.0, %v811
        %813 = vmatmul.bf16.gmra.mxu0 %v736
        %v814 = vpop.f32.mrf.mxu0
        %v815 = vadd.f32 0.0, %v814
        %v816 = vpop.f32.mrf.mxu0
        %v817 = vadd.f32 0.0, %v816
        %818 = vmatmul.bf16.gmra.mxu0 %v739
        %v819 = vpop.f32.mrf.mxu0
        %v820 = vadd.f32 0.0, %v819
        %v821 = vpop.f32.mrf.mxu0
        %v822 = vadd.f32 0.0, %v821
        %823 = vmatmul.bf16.gmra.mxu0 %v742
        %v824 = vpop.f32.mrf.mxu0
        %v825 = vadd.f32 0.0, %v824
        %v826 = vpop.f32.mrf.mxu0
        %v827 = vadd.f32 0.0, %v826
        %828 = vmatmul.bf16.gmra.mxu0 %v745
        %v829 = vpop.f32.mrf.mxu0
        %v830 = vadd.f32 0.0, %v829
        %v831 = vpop.f32.mrf.mxu0
        %v832 = vadd.f32 0.0, %v831
        %833 = vmatmul.bf16.gmra.mxu0 %v748
        %v834 = vpop.f32.mrf.mxu0
        %v835 = vadd.f32 0.0, %v834
        %v836 = vpop.f32.mrf.mxu0
        %v837 = vadd.f32 0.0, %v836
        %838 = vmatmul.bf16.gmra.mxu0 %v751
        %v839 = vpop.f32.mrf.mxu0
        %v840 = vadd.f32 0.0, %v839
        %v841 = vpop.f32.mrf.mxu0
        %v842 = vadd.f32 0.0, %v841
        %843 = vmatmul.bf16.gmra.mxu0 %v754
        %v844 = vpop.f32.mrf.mxu0
        %v845 = vadd.f32 0.0, %v844
        %v846 = vpop.f32.mrf.mxu0
        %v847 = vadd.f32 0.0, %v846
        %848 = vdwg.mxu0
        %v881 = vunpack.c.l.b16 %v218
        %v882 = vunpack.c.l.b16 %v219
        %v883 = vunpack.c.l.b16 %v221
        %v884 = vunpack.c.l.b16 %v222
        %v885 = vunpack.c.l.b16 %v224
        %v886 = vunpack.c.l.b16 %v225
        %v887 = vunpack.c.l.b16 %v227
        %v888 = vunpack.c.l.b16 %v228
        %v889 = vunpack.c.l.b16 %v230
        %v890 = vunpack.c.l.b16 %v231
        %v891 = vunpack.c.l.b16 %v233
        %v892 = vunpack.c.l.b16 %v234
        %v893 = vunpack.c.l.b16 %v236
        %v894 = vunpack.c.l.b16 %v237
        %v895 = vunpack.c.l.b16 %v239
        %v896 = vunpack.c.l.b16 %v240
        %v897 = vunpack.c.l.b16 %v242
        %v898 = vunpack.c.l.b16 %v243
        %v899 = vunpack.c.l.b16 %v245
        %v900 = vunpack.c.l.b16 %v246
        %v901 = vunpack.c.l.b16 %v248
        %v902 = vunpack.c.l.b16 %v249
        %v903 = vunpack.c.l.b16 %v251
        %v904 = vunpack.c.l.b16 %v252
        %v905 = vunpack.c.l.b16 %v254
        %v906 = vunpack.c.l.b16 %v255
        %v907 = vunpack.c.l.b16 %v257
        %v908 = vunpack.c.l.b16 %v258
        %v909 = vunpack.c.l.b16 %v260
        %v910 = vunpack.c.l.b16 %v261
        %v911 = vunpack.c.l.b16 %v263
        %v912 = vunpack.c.l.b16 %v264
        %v913 = vpack.c.b16 %v882, %v881
        %v914 = vpack.c.b16 %v884, %v883
        %v915 = vpack.c.b16 %v886, %v885
        %v916 = vpack.c.b16 %v888, %v887
        %v917 = vpack.c.b16 %v890, %v889
        %v918 = vpack.c.b16 %v892, %v891
        %v919 = vpack.c.b16 %v894, %v893
        %v920 = vpack.c.b16 %v896, %v895
        %v921 = vpack.c.b16 %v898, %v897
        %v922 = vpack.c.b16 %v900, %v899
        %v923 = vpack.c.b16 %v902, %v901
        %v924 = vpack.c.b16 %v904, %v903
        %v925 = vpack.c.b16 %v906, %v905
        %v926 = vpack.c.b16 %v908, %v907
        %v927 = vpack.c.b16 %v910, %v909
        %v928 = vpack.c.b16 %v912, %v911
        %v930 = vsel %vm707, %v913, 0
        %v933 = vsel %vm707, %v914, 0
        %v936 = vsel %vm707, %v915, 0
        %v939 = vsel %vm707, %v916, 0
        %v942 = vsel %vm707, %v917, 0
        %v945 = vsel %vm707, %v918, 0
        %v948 = vsel %vm707, %v919, 0
        %v951 = vsel %vm707, %v920, 0
        %v954 = vsel %vm707, %v921, 0
        %v957 = vsel %vm707, %v922, 0
        %v960 = vsel %vm707, %v923, 0
        %v963 = vsel %vm707, %v924, 0
        %v966 = vsel %vm707, %v925, 0
        %v969 = vsel %vm707, %v926, 0
        %v972 = vsel %vm707, %v927, 0
        %v975 = vsel %vm707, %v928, 0
        %v978 = vsel %vm756, %v269, 0
        %980 = vmatpush.bf16.msra.mxu0 0
        %981 = vmatpush.bf16.msra.mxu0 0
        %982 = vmatpush.bf16.msra.mxu0 0
        %983 = vmatpush.bf16.msra.mxu0 0
        %984 = vmatpush.bf16.msra.mxu0 0
        %985 = vmatpush.bf16.msra.mxu0 0
        %986 = vmatpush.bf16.msra.mxu0 0
        %987 = vmatpush.bf16.msra.mxu0 %v978
        %988 = vmatmul.bf16.gmra.mxu0 %v930
        %v989 = vpop.f32.mrf.mxu0
        %v990 = vadd.f32 %v770, %v989
        %v991 = vpop.f32.mrf.mxu0
        %v992 = vadd.f32 %v772, %v991
        %993 = vmatmul.bf16.gmra.mxu0 %v933
        %v994 = vpop.f32.mrf.mxu0
        %v995 = vadd.f32 %v775, %v994
        %v996 = vpop.f32.mrf.mxu0
        %v997 = vadd.f32 %v777, %v996
        %998 = vmatmul.bf16.gmra.mxu0 %v936
        %v999 = vpop.f32.mrf.mxu0
        %v1000 = vadd.f32 %v780, %v999
        %v1001 = vpop.f32.mrf.mxu0
        %v1002 = vadd.f32 %v782, %v1001
        %1003 = vmatmul.bf16.gmra.mxu0 %v939
        %v1004 = vpop.f32.mrf.mxu0
        %v1005 = vadd.f32 %v785, %v1004
        %v1006 = vpop.f32.mrf.mxu0
        %v1007 = vadd.f32 %v787, %v1006
        %1008 = vmatmul.bf16.gmra.mxu0 %v942
        %v1009 = vpop.f32.mrf.mxu0
        %v1010 = vadd.f32 %v790, %v1009
        %v1011 = vpop.f32.mrf.mxu0
        %v1012 = vadd.f32 %v792, %v1011
        %1013 = vmatmul.bf16.gmra.mxu0 %v945
        %v1014 = vpop.f32.mrf.mxu0
        %v1015 = vadd.f32 %v795, %v1014
        %v1016 = vpop.f32.mrf.mxu0
        %v1017 = vadd.f32 %v797, %v1016
        %1018 = vmatmul.bf16.gmra.mxu0 %v948
        %v1019 = vpop.f32.mrf.mxu0
        %v1020 = vadd.f32 %v800, %v1019
        %v1021 = vpop.f32.mrf.mxu0
        %v1022 = vadd.f32 %v802, %v1021
        %1023 = vmatmul.bf16.gmra.mxu0 %v951
        %v1024 = vpop.f32.mrf.mxu0
        %v1025 = vadd.f32 %v805, %v1024
        %v1026 = vpop.f32.mrf.mxu0
        %v1027 = vadd.f32 %v807, %v1026
        %1028 = vmatmul.bf16.gmra.mxu0 %v954
        %v1029 = vpop.f32.mrf.mxu0
        %v1030 = vadd.f32 %v810, %v1029
        %v1031 = vpop.f32.mrf.mxu0
        %v1032 = vadd.f32 %v812, %v1031
        %1033 = vmatmul.bf16.gmra.mxu0 %v957
        %v1034 = vpop.f32.mrf.mxu0
        %v1035 = vadd.f32 %v815, %v1034
        %v1036 = vpop.f32.mrf.mxu0
        %v1037 = vadd.f32 %v817, %v1036
        %1038 = vmatmul.bf16.gmra.mxu0 %v960
        %v1039 = vpop.f32.mrf.mxu0
        %v1040 = vadd.f32 %v820, %v1039
        %v1041 = vpop.f32.mrf.mxu0
        %v1042 = vadd.f32 %v822, %v1041
        %1043 = vmatmul.bf16.gmra.mxu0 %v963
        %v1044 = vpop.f32.mrf.mxu0
        %v1045 = vadd.f32 %v825, %v1044
        %v1046 = vpop.f32.mrf.mxu0
        %v1047 = vadd.f32 %v827, %v1046
        %1048 = vmatmul.bf16.gmra.mxu0 %v966
        %v1049 = vpop.f32.mrf.mxu0
        %v1050 = vadd.f32 %v830, %v1049
        %v1051 = vpop.f32.mrf.mxu0
        %v1052 = vadd.f32 %v832, %v1051
        %1053 = vmatmul.bf16.gmra.mxu0 %v969
        %v1054 = vpop.f32.mrf.mxu0
        %v1055 = vadd.f32 %v835, %v1054
        %v1056 = vpop.f32.mrf.mxu0
        %v1057 = vadd.f32 %v837, %v1056
        %1058 = vmatmul.bf16.gmra.mxu0 %v972
        %v1059 = vpop.f32.mrf.mxu0
        %v1060 = vadd.f32 %v840, %v1059
        %v1061 = vpop.f32.mrf.mxu0
        %v1062 = vadd.f32 %v842, %v1061
        %1063 = vmatmul.bf16.gmra.mxu0 %v975
        %v1064 = vpop.f32.mrf.mxu0
        %v1065 = vadd.f32 %v845, %v1064
        %v1066 = vpop.f32.mrf.mxu0
        %v1067 = vadd.f32 %v847, %v1066
        %1068 = vdwg.mxu0
        %s1069 = scalar_lea.vmem %s1, 4
        %v1070 = vld [vmem:[%s1069] sm:$0x3]
        %v1073 = vunpack.c.l.b16 %v266
        %v1074 = vunpack.c.l.b16 %v267
        %v1075 = vpack.c.b16 %v1074, %v1073
        %v1077 = vsel %vm707, %v1075, 0
        %v1080 = vsel %vm756, %v1070, 0
        %1082 = vmatpush.bf16.msra.mxu0 0
        %1083 = vmatpush.bf16.msra.mxu0 0
        %1084 = vmatpush.bf16.msra.mxu0 0
        %1085 = vmatpush.bf16.msra.mxu0 0
        %1086 = vmatpush.bf16.msra.mxu0 0
        %1087 = vmatpush.bf16.msra.mxu0 0
        %1088 = vmatpush.bf16.msra.mxu0 0
        %1089 = vmatpush.bf16.msra.mxu0 %v1080
        %1090 = vmatmul.bf16.gmra.mxu0 %v933
        %v1091 = vpop.f32.mrf.mxu0
        %v1092 = vadd.f32 0.0, %v1091
        %v1093 = vpop.f32.mrf.mxu0
        %v1094 = vadd.f32 0.0, %v1093
        %1095 = vmatmul.bf16.gmra.mxu0 %v936
        %v1096 = vpop.f32.mrf.mxu0
        %v1097 = vadd.f32 0.0, %v1096
        %v1098 = vpop.f32.mrf.mxu0
        %v1099 = vadd.f32 0.0, %v1098
        %1100 = vmatmul.bf16.gmra.mxu0 %v939
        %v1101 = vpop.f32.mrf.mxu0
        %v1102 = vadd.f32 0.0, %v1101
        %v1103 = vpop.f32.mrf.mxu0
        %v1104 = vadd.f32 0.0, %v1103
        %1105 = vmatmul.bf16.gmra.mxu0 %v942
        %v1106 = vpop.f32.mrf.mxu0
        %v1107 = vadd.f32 0.0, %v1106
        %v1108 = vpop.f32.mrf.mxu0
        %v1109 = vadd.f32 0.0, %v1108
        %1110 = vmatmul.bf16.gmra.mxu0 %v945
        %v1111 = vpop.f32.mrf.mxu0
        %v1112 = vadd.f32 0.0, %v1111
        %v1113 = vpop.f32.mrf.mxu0
        %v1114 = vadd.f32 0.0, %v1113
        %1115 = vmatmul.bf16.gmra.mxu0 %v948
        %v1116 = vpop.f32.mrf.mxu0
        %v1117 = vadd.f32 0.0, %v1116
        %v1118 = vpop.f32.mrf.mxu0
        %v1119 = vadd.f32 0.0, %v1118
        %1120 = vmatmul.bf16.gmra.mxu0 %v951
        %v1121 = vpop.f32.mrf.mxu0
        %v1122 = vadd.f32 0.0, %v1121
        %v1123 = vpop.f32.mrf.mxu0
        %v1124 = vadd.f32 0.0, %v1123
        %1125 = vmatmul.bf16.gmra.mxu0 %v954
        %v1126 = vpop.f32.mrf.mxu0
        %v1127 = vadd.f32 0.0, %v1126
        %v1128 = vpop.f32.mrf.mxu0
        %v1129 = vadd.f32 0.0, %v1128
        %1130 = vmatmul.bf16.gmra.mxu0 %v957
        %v1131 = vpop.f32.mrf.mxu0
        %v1132 = vadd.f32 0.0, %v1131
        %v1133 = vpop.f32.mrf.mxu0
        %v1134 = vadd.f32 0.0, %v1133
        %1135 = vmatmul.bf16.gmra.mxu0 %v960
        %v1136 = vpop.f32.mrf.mxu0
        %v1137 = vadd.f32 0.0, %v1136
        %v1138 = vpop.f32.mrf.mxu0
        %v1139 = vadd.f32 0.0, %v1138
        %1140 = vmatmul.bf16.gmra.mxu0 %v963
        %v1141 = vpop.f32.mrf.mxu0
        %v1142 = vadd.f32 0.0, %v1141
        %v1143 = vpop.f32.mrf.mxu0
        %v1144 = vadd.f32 0.0, %v1143
        %1145 = vmatmul.bf16.gmra.mxu0 %v966
        %v1146 = vpop.f32.mrf.mxu0
        %v1147 = vadd.f32 0.0, %v1146
        %v1148 = vpop.f32.mrf.mxu0
        %v1149 = vadd.f32 0.0, %v1148
        %1150 = vmatmul.bf16.gmra.mxu0 %v969
        %v1151 = vpop.f32.mrf.mxu0
        %v1152 = vadd.f32 0.0, %v1151
        %v1153 = vpop.f32.mrf.mxu0
        %v1154 = vadd.f32 0.0, %v1153
        %1155 = vmatmul.bf16.gmra.mxu0 %v972
        %v1156 = vpop.f32.mrf.mxu0
        %v1157 = vadd.f32 0.0, %v1156
        %v1158 = vpop.f32.mrf.mxu0
        %v1159 = vadd.f32 0.0, %v1158
        %1160 = vmatmul.bf16.gmra.mxu0 %v975
        %v1161 = vpop.f32.mrf.mxu0
        %v1162 = vadd.f32 0.0, %v1161
        %v1163 = vpop.f32.mrf.mxu0
        %v1164 = vadd.f32 0.0, %v1163
        %1165 = vmatmul.bf16.gmra.mxu0 %v1077
        %v1166 = vpop.f32.mrf.mxu0
        %v1167 = vadd.f32 0.0, %v1166
        %v1168 = vpop.f32.mrf.mxu0
        %v1169 = vadd.f32 0.0, %v1168
        %1170 = vdwg.mxu0
        %v1171 = vadd.f32 %v990, %v1092
        %v1172 = vadd.f32 %v992, %v1094
        %v1173 = vadd.f32 %v995, %v1097
        %v1174 = vadd.f32 %v997, %v1099
        %v1175 = vadd.f32 %v1000, %v1102
        %v1176 = vadd.f32 %v1002, %v1104
        %v1177 = vadd.f32 %v1005, %v1107
        %v1178 = vadd.f32 %v1007, %v1109
        %v1179 = vadd.f32 %v1010, %v1112
        %v1180 = vadd.f32 %v1012, %v1114
        %v1181 = vadd.f32 %v1015, %v1117
        %v1182 = vadd.f32 %v1017, %v1119
        %v1183 = vadd.f32 %v1020, %v1122
        %v1184 = vadd.f32 %v1022, %v1124
        %v1185 = vadd.f32 %v1025, %v1127
        %v1186 = vadd.f32 %v1027, %v1129
        %v1187 = vadd.f32 %v1030, %v1132
        %v1188 = vadd.f32 %v1032, %v1134
        %v1189 = vadd.f32 %v1035, %v1137
        %v1190 = vadd.f32 %v1037, %v1139
        %v1191 = vadd.f32 %v1040, %v1142
        %v1192 = vadd.f32 %v1042, %v1144
        %v1193 = vadd.f32 %v1045, %v1147
        %v1194 = vadd.f32 %v1047, %v1149
        %v1195 = vadd.f32 %v1050, %v1152
        %v1196 = vadd.f32 %v1052, %v1154
        %v1197 = vadd.f32 %v1055, %v1157
        %v1198 = vadd.f32 %v1057, %v1159
        %v1199 = vadd.f32 %v1060, %v1162
        %v1200 = vadd.f32 %v1062, %v1164
        %v1201 = vadd.f32 %v1065, %v1167
        %v1202 = vadd.f32 %v1067, %v1169
        %v1204 = vshrl.u32 %v266, 16
        %v1206 = vrot.slane %v1204, 4
        %v1207 = vshll.u32 %v266, 16
        %v1209 = vrot.slane %v1207, 5
        %v1210 = vor.u32 %v1206, %v1209
        %v1211 = vrot.slane %v1210, 4
        %v1213 = vshll.u32 %v267, 16
        %v1215 = vrot.slane %v1213, 5
        %v1216 = vsel %vm272, %v1211, %v1215
        %v1217 = vshrl.u32 %v267, 16
        %v1219 = vrot.slane %v1217, 4
        %v1220 = vor.u32 %v1219, %v1215
        %v1221 = vrot.slane %v1220, 4
        %v1223 = vshll.u32 %v268, 16
        %v1225 = vrot.slane %v1223, 5
        %v1226 = vsel %vm272, %v1221, %v1225
        %s1227 = scalar_lea.vmem %s1, 6
        %v1228 = vld [vmem:[%s1227] sm:$0x3]
        %v1229 = vunpack.c.l.b16 %v1216
        %v1230 = vunpack.c.l.b16 %v1226
        %v1231 = vpack.c.b16 %v1230, %v1229
        %v1233 = vsel %vm707, %v1231, 0
        %v1236 = vsel %vm756, %v1228, 0
        %1238 = vmatpush.bf16.msra.mxu0 0
        %1239 = vmatpush.bf16.msra.mxu0 0
        %1240 = vmatpush.bf16.msra.mxu0 0
        %1241 = vmatpush.bf16.msra.mxu0 0
        %1242 = vmatpush.bf16.msra.mxu0 0
        %1243 = vmatpush.bf16.msra.mxu0 0
        %1244 = vmatpush.bf16.msra.mxu0 0
        %1245 = vmatpush.bf16.msra.mxu0 %v1236
        %1246 = vmatmul.bf16.gmra.mxu0 %v712
        %v1247 = vpop.f32.mrf.mxu0
        %v1248 = vadd.f32 0.0, %v1247
        %v1249 = vpop.f32.mrf.mxu0
        %v1250 = vadd.f32 0.0, %v1249
        %1251 = vmatmul.bf16.gmra.mxu0 %v715
        %v1252 = vpop.f32.mrf.mxu0
        %v1253 = vadd.f32 0.0, %v1252
        %v1254 = vpop.f32.mrf.mxu0
        %v1255 = vadd.f32 0.0, %v1254
        %1256 = vmatmul.bf16.gmra.mxu0 %v718
        %v1257 = vpop.f32.mrf.mxu0
        %v1258 = vadd.f32 0.0, %v1257
        %v1259 = vpop.f32.mrf.mxu0
        %v1260 = vadd.f32 0.0, %v1259
        %1261 = vmatmul.bf16.gmra.mxu0 %v721
        %v1262 = vpop.f32.mrf.mxu0
        %v1263 = vadd.f32 0.0, %v1262
        %v1264 = vpop.f32.mrf.mxu0
        %v1265 = vadd.f32 0.0, %v1264
        %1266 = vmatmul.bf16.gmra.mxu0 %v724
        %v1267 = vpop.f32.mrf.mxu0
        %v1268 = vadd.f32 0.0, %v1267
        %v1269 = vpop.f32.mrf.mxu0
        %v1270 = vadd.f32 0.0, %v1269
        %1271 = vmatmul.bf16.gmra.mxu0 %v727
        %v1272 = vpop.f32.mrf.mxu0
        %v1273 = vadd.f32 0.0, %v1272
        %v1274 = vpop.f32.mrf.mxu0
        %v1275 = vadd.f32 0.0, %v1274
        %1276 = vmatmul.bf16.gmra.mxu0 %v730
        %v1277 = vpop.f32.mrf.mxu0
        %v1278 = vadd.f32 0.0, %v1277
        %v1279 = vpop.f32.mrf.mxu0
        %v1280 = vadd.f32 0.0, %v1279
        %1281 = vmatmul.bf16.gmra.mxu0 %v733
        %v1282 = vpop.f32.mrf.mxu0
        %v1283 = vadd.f32 0.0, %v1282
        %v1284 = vpop.f32.mrf.mxu0
        %v1285 = vadd.f32 0.0, %v1284
        %1286 = vmatmul.bf16.gmra.mxu0 %v736
        %v1287 = vpop.f32.mrf.mxu0
        %v1288 = vadd.f32 0.0, %v1287
        %v1289 = vpop.f32.mrf.mxu0
        %v1290 = vadd.f32 0.0, %v1289
        %1291 = vmatmul.bf16.gmra.mxu0 %v739
        %v1292 = vpop.f32.mrf.mxu0
        %v1293 = vadd.f32 0.0, %v1292
        %v1294 = vpop.f32.mrf.mxu0
        %v1295 = vadd.f32 0.0, %v1294
        %1296 = vmatmul.bf16.gmra.mxu0 %v742
        %v1297 = vpop.f32.mrf.mxu0
        %v1298 = vadd.f32 0.0, %v1297
        %v1299 = vpop.f32.mrf.mxu0
        %v1300 = vadd.f32 0.0, %v1299
        %1301 = vmatmul.bf16.gmra.mxu0 %v745
        %v1302 = vpop.f32.mrf.mxu0
        %v1303 = vadd.f32 0.0, %v1302
        %v1304 = vpop.f32.mrf.mxu0
        %v1305 = vadd.f32 0.0, %v1304
        %1306 = vmatmul.bf16.gmra.mxu0 %v748
        %v1307 = vpop.f32.mrf.mxu0
        %v1308 = vadd.f32 0.0, %v1307
        %v1309 = vpop.f32.mrf.mxu0
        %v1310 = vadd.f32 0.0, %v1309
        %1311 = vmatmul.bf16.gmra.mxu0 %v751
        %v1312 = vpop.f32.mrf.mxu0
        %v1313 = vadd.f32 0.0, %v1312
        %v1314 = vpop.f32.mrf.mxu0
        %v1315 = vadd.f32 0.0, %v1314
        %1316 = vmatmul.bf16.gmra.mxu0 %v754
        %v1317 = vpop.f32.mrf.mxu0
        %v1318 = vadd.f32 0.0, %v1317
        %v1319 = vpop.f32.mrf.mxu0
        %v1320 = vadd.f32 0.0, %v1319
        %1321 = vmatmul.bf16.gmra.mxu0 %v1233
        %v1322 = vpop.f32.mrf.mxu0
        %v1323 = vadd.f32 0.0, %v1322
        %v1324 = vpop.f32.mrf.mxu0
        %v1325 = vadd.f32 0.0, %v1324
        %1326 = vdwg.mxu0
        %v1327 = vadd.f32 %v1171, %v1248
        %v1328 = vadd.f32 %v1172, %v1250
        %v1329 = vadd.f32 %v1173, %v1253
        %v1330 = vadd.f32 %v1174, %v1255
        %v1331 = vadd.f32 %v1175, %v1258
        %v1332 = vadd.f32 %v1176, %v1260
        %v1333 = vadd.f32 %v1177, %v1263
        %v1334 = vadd.f32 %v1178, %v1265
        %v1335 = vadd.f32 %v1179, %v1268
        %v1336 = vadd.f32 %v1180, %v1270
        %v1337 = vadd.f32 %v1181, %v1273
        %v1338 = vadd.f32 %v1182, %v1275
        %v1339 = vadd.f32 %v1183, %v1278
        %v1340 = vadd.f32 %v1184, %v1280
        %v1341 = vadd.f32 %v1185, %v1283
        %v1342 = vadd.f32 %v1186, %v1285
        %v1343 = vadd.f32 %v1187, %v1288
        %v1344 = vadd.f32 %v1188, %v1290
        %v1345 = vadd.f32 %v1189, %v1293
        %v1346 = vadd.f32 %v1190, %v1295
        %v1347 = vadd.f32 %v1191, %v1298
        %v1348 = vadd.f32 %v1192, %v1300
        %v1349 = vadd.f32 %v1193, %v1303
        %v1350 = vadd.f32 %v1194, %v1305
        %v1351 = vadd.f32 %v1195, %v1308
        %v1352 = vadd.f32 %v1196, %v1310
        %v1353 = vadd.f32 %v1197, %v1313
        %v1354 = vadd.f32 %v1198, %v1315
        %v1355 = vadd.f32 %v1199, %v1318
        %v1356 = vadd.f32 %v1200, %v1320
        %v1357 = vadd.f32 %v1201, %v1323
        %v1358 = vadd.f32 %v1202, %v1325
        %vm1359 = vcmask 261120
        %1360 = vst.msk [vmem:[%s216] sm:$0xff] %vm1359, %v1327
        %1361 = vst.msk [vmem:[%s216 + $0x8] sm:$0xff] %vm1359, %v1328
        %1362 = vst.msk [vmem:[%s216 + $0x10] sm:$0xff] %vm1359, %v1329
        %1363 = vst.msk [vmem:[%s216 + $0x18] sm:$0xff] %vm1359, %v1330
        %1364 = vst.msk [vmem:[%s216 + $0x20] sm:$0xff] %vm1359, %v1331
        %1365 = vst.msk [vmem:[%s216 + $0x28] sm:$0xff] %vm1359, %v1332
        %1366 = vst.msk [vmem:[%s216 + $0x30] sm:$0xff] %vm1359, %v1333
        %1367 = vst.msk [vmem:[%s216 + $0x38] sm:$0xff] %vm1359, %v1334
        %1368 = vst.msk [vmem:[%s216 + $0x40] sm:$0xff] %vm1359, %v1335
        %1369 = vst.msk [vmem:[%s216 + $0x48] sm:$0xff] %vm1359, %v1336
        %1370 = vst.msk [vmem:[%s216 + $0x50] sm:$0xff] %vm1359, %v1337
        %1371 = vst.msk [vmem:[%s216 + $0x58] sm:$0xff] %vm1359, %v1338
        %1372 = vst.msk [vmem:[%s216 + $0x60] sm:$0xff] %vm1359, %v1339
        %1373 = vst.msk [vmem:[%s216 + $0x68] sm:$0xff] %vm1359, %v1340
        %1374 = vst.msk [vmem:[%s216 + $0x70] sm:$0xff] %vm1359, %v1341
        %1375 = vst.msk [vmem:[%s216 + $0x78] sm:$0xff] %vm1359, %v1342
        %1376 = vst.msk [vmem:[%s216 + $0x80] sm:$0xff] %vm1359, %v1343
        %1377 = vst.msk [vmem:[%s216 + $0x88] sm:$0xff] %vm1359, %v1344
        %1378 = vst.msk [vmem:[%s216 + $0x90] sm:$0xff] %vm1359, %v1345
        %1379 = vst.msk [vmem:[%s216 + $0x98] sm:$0xff] %vm1359, %v1346
        %1380 = vst.msk [vmem:[%s216 + $0xa0] sm:$0xff] %vm1359, %v1347
        %1381 = vst.msk [vmem:[%s216 + $0xa8] sm:$0xff] %vm1359, %v1348
        %1382 = vst.msk [vmem:[%s216 + $0xb0] sm:$0xff] %vm1359, %v1349
        %1383 = vst.msk [vmem:[%s216 + $0xb8] sm:$0xff] %vm1359, %v1350
        %1384 = vst.msk [vmem:[%s216 + $0xc0] sm:$0xff] %vm1359, %v1351
        %1385 = vst.msk [vmem:[%s216 + $0xc8] sm:$0xff] %vm1359, %v1352
        %1386 = vst.msk [vmem:[%s216 + $0xd0] sm:$0xff] %vm1359, %v1353
        %1387 = vst.msk [vmem:[%s216 + $0xd8] sm:$0xff] %vm1359, %v1354
        %1388 = vst.msk [vmem:[%s216 + $0xe0] sm:$0xff] %vm1359, %v1355
        %1389 = vst.msk [vmem:[%s216 + $0xe8] sm:$0xff] %vm1359, %v1356
        %1390 = vst.msk [vmem:[%s216 + $0xf0] sm:$0xff] %vm1359, %v1357
        %1391 = vst.msk [vmem:[%s216 + $0xf8] sm:$0xff] %vm1359, %v1358
        %v1392 = vsel %vm1359, %v1327, 0.0
        %v1393 = vsel %vm1359, %v1328, 0.0
        %v1394 = vadd.f32 %v1392, %v1393
        %v1395 = vsel %vm1359, %v1329, 0.0
        %v1396 = vadd.f32 %v1394, %v1395
        %v1397 = vsel %vm1359, %v1330, 0.0
        %v1398 = vadd.f32 %v1396, %v1397
        %v1399 = vsel %vm1359, %v1331, 0.0
        %v1400 = vadd.f32 %v1398, %v1399
        %v1401 = vsel %vm1359, %v1332, 0.0
        %v1402 = vadd.f32 %v1400, %v1401
        %v1403 = vsel %vm1359, %v1333, 0.0
        %v1404 = vadd.f32 %v1402, %v1403
        %v1405 = vsel %vm1359, %v1334, 0.0
        %v1406 = vadd.f32 %v1404, %v1405
        %v1407 = vsel %vm1359, %v1335, 0.0
        %v1408 = vadd.f32 %v1406, %v1407
        %v1409 = vsel %vm1359, %v1336, 0.0
        %v1410 = vadd.f32 %v1408, %v1409
        %v1411 = vsel %vm1359, %v1337, 0.0
        %v1412 = vadd.f32 %v1410, %v1411
        %v1413 = vsel %vm1359, %v1338, 0.0
        %v1414 = vadd.f32 %v1412, %v1413
        %v1415 = vsel %vm1359, %v1339, 0.0
        %v1416 = vadd.f32 %v1414, %v1415
        %v1417 = vsel %vm1359, %v1340, 0.0
        %v1418 = vadd.f32 %v1416, %v1417
        %v1419 = vsel %vm1359, %v1341, 0.0
        %v1420 = vadd.f32 %v1418, %v1419
        %v1421 = vsel %vm1359, %v1342, 0.0
        %v1422 = vadd.f32 %v1420, %v1421
        %v1423 = vsel %vm1359, %v1343, 0.0
        %v1424 = vadd.f32 %v1422, %v1423
        %v1425 = vsel %vm1359, %v1344, 0.0
        %v1426 = vadd.f32 %v1424, %v1425
        %v1427 = vsel %vm1359, %v1345, 0.0
        %v1428 = vadd.f32 %v1426, %v1427
        %v1429 = vsel %vm1359, %v1346, 0.0
        %v1430 = vadd.f32 %v1428, %v1429
        %v1431 = vsel %vm1359, %v1347, 0.0
        %v1432 = vadd.f32 %v1430, %v1431
        %v1433 = vsel %vm1359, %v1348, 0.0
        %v1434 = vadd.f32 %v1432, %v1433
        %v1435 = vsel %vm1359, %v1349, 0.0
        %v1436 = vadd.f32 %v1434, %v1435
        %v1437 = vsel %vm1359, %v1350, 0.0
        %v1438 = vadd.f32 %v1436, %v1437
        %v1439 = vsel %vm1359, %v1351, 0.0
        %v1440 = vadd.f32 %v1438, %v1439
        %v1441 = vsel %vm1359, %v1352, 0.0
        %v1442 = vadd.f32 %v1440, %v1441
        %v1443 = vsel %vm1359, %v1353, 0.0
        %v1444 = vadd.f32 %v1442, %v1443
        %v1445 = vsel %vm1359, %v1354, 0.0
        %v1446 = vadd.f32 %v1444, %v1445
        %v1447 = vsel %vm1359, %v1355, 0.0
        %v1448 = vadd.f32 %v1446, %v1447
        %v1449 = vsel %vm1359, %v1356, 0.0
        %v1450 = vadd.f32 %v1448, %v1449
        %v1451 = vsel %vm1359, %v1357, 0.0
        %v1452 = vadd.f32 %v1450, %v1451
        %v1453 = vsel %vm1359, %v1358, 0.0
        %v1454 = vadd.f32 %v1452, %v1453
        %v1455 = vrot.slane %v1454, 4
        %v1456 = vadd.f32 %v1454, %v1455
        %v1457 = vrot.slane %v1456, 2
        %v1458 = vadd.f32 %v1456, %v1457
        %v1459 = vrot.slane %v1458, 1
        %v1460 = vadd.f32 %v1458, %v1459
        %vm1461 = vcmask 253952
        %1462 = vst.msk [vmem:[%s200] sm:$0x1] %vm1461, %v1460
        %v1463 = vmul.f32 %v1327, %v1327
        %v1464 = vmul.f32 %v1328, %v1328
        %v1465 = vmul.f32 %v1329, %v1329
        %v1466 = vmul.f32 %v1330, %v1330
        %v1467 = vmul.f32 %v1331, %v1331
        %v1468 = vmul.f32 %v1332, %v1332
        %v1469 = vmul.f32 %v1333, %v1333
        %v1470 = vmul.f32 %v1334, %v1334
        %v1471 = vmul.f32 %v1335, %v1335
        %v1472 = vmul.f32 %v1336, %v1336
        %v1473 = vmul.f32 %v1337, %v1337
        %v1474 = vmul.f32 %v1338, %v1338
        %v1475 = vmul.f32 %v1339, %v1339
        %v1476 = vmul.f32 %v1340, %v1340
        %v1477 = vmul.f32 %v1341, %v1341
        %v1478 = vmul.f32 %v1342, %v1342
        %v1479 = vmul.f32 %v1343, %v1343
        %v1480 = vmul.f32 %v1344, %v1344
        %v1481 = vmul.f32 %v1345, %v1345
        %v1482 = vmul.f32 %v1346, %v1346
        %v1483 = vmul.f32 %v1347, %v1347
        %v1484 = vmul.f32 %v1348, %v1348
        %v1485 = vmul.f32 %v1349, %v1349
        %v1486 = vmul.f32 %v1350, %v1350
        %v1487 = vmul.f32 %v1351, %v1351
        %v1488 = vmul.f32 %v1352, %v1352
        %v1489 = vmul.f32 %v1353, %v1353
        %v1490 = vmul.f32 %v1354, %v1354
        %v1491 = vmul.f32 %v1355, %v1355
        %v1492 = vmul.f32 %v1356, %v1356
        %v1493 = vmul.f32 %v1357, %v1357
        %v1494 = vmul.f32 %v1358, %v1358
        %v1495 = vsel %vm1359, %v1463, 0.0
        %v1496 = vsel %vm1359, %v1464, 0.0
        %v1497 = vadd.f32 %v1495, %v1496
        %v1498 = vsel %vm1359, %v1465, 0.0
        %v1499 = vadd.f32 %v1497, %v1498
        %v1500 = vsel %vm1359, %v1466, 0.0
        %v1501 = vadd.f32 %v1499, %v1500
        %v1502 = vsel %vm1359, %v1467, 0.0
        %v1503 = vadd.f32 %v1501, %v1502
        %v1504 = vsel %vm1359, %v1468, 0.0
        %v1505 = vadd.f32 %v1503, %v1504
        %v1506 = vsel %vm1359, %v1469, 0.0
        %v1507 = vadd.f32 %v1505, %v1506
        %v1508 = vsel %vm1359, %v1470, 0.0
        %v1509 = vadd.f32 %v1507, %v1508
        %v1510 = vsel %vm1359, %v1471, 0.0
        %v1511 = vadd.f32 %v1509, %v1510
        %v1512 = vsel %vm1359, %v1472, 0.0
        %v1513 = vadd.f32 %v1511, %v1512
        %v1514 = vsel %vm1359, %v1473, 0.0
        %v1515 = vadd.f32 %v1513, %v1514
        %v1516 = vsel %vm1359, %v1474, 0.0
        %v1517 = vadd.f32 %v1515, %v1516
        %v1518 = vsel %vm1359, %v1475, 0.0
        %v1519 = vadd.f32 %v1517, %v1518
        %v1520 = vsel %vm1359, %v1476, 0.0
        %v1521 = vadd.f32 %v1519, %v1520
        %v1522 = vsel %vm1359, %v1477, 0.0
        %v1523 = vadd.f32 %v1521, %v1522
        %v1524 = vsel %vm1359, %v1478, 0.0
        %v1525 = vadd.f32 %v1523, %v1524
        %v1526 = vsel %vm1359, %v1479, 0.0
        %v1527 = vadd.f32 %v1525, %v1526
        %v1528 = vsel %vm1359, %v1480, 0.0
        %v1529 = vadd.f32 %v1527, %v1528
        %v1530 = vsel %vm1359, %v1481, 0.0
        %v1531 = vadd.f32 %v1529, %v1530
        %v1532 = vsel %vm1359, %v1482, 0.0
        %v1533 = vadd.f32 %v1531, %v1532
        %v1534 = vsel %vm1359, %v1483, 0.0
        %v1535 = vadd.f32 %v1533, %v1534
        %v1536 = vsel %vm1359, %v1484, 0.0
        %v1537 = vadd.f32 %v1535, %v1536
        %v1538 = vsel %vm1359, %v1485, 0.0
        %v1539 = vadd.f32 %v1537, %v1538
        %v1540 = vsel %vm1359, %v1486, 0.0
        %v1541 = vadd.f32 %v1539, %v1540
        %v1542 = vsel %vm1359, %v1487, 0.0
        %v1543 = vadd.f32 %v1541, %v1542
        %v1544 = vsel %vm1359, %v1488, 0.0
        %v1545 = vadd.f32 %v1543, %v1544
        %v1546 = vsel %vm1359, %v1489, 0.0
        %v1547 = vadd.f32 %v1545, %v1546
        %v1548 = vsel %vm1359, %v1490, 0.0
        %v1549 = vadd.f32 %v1547, %v1548
        %v1550 = vsel %vm1359, %v1491, 0.0
        %v1551 = vadd.f32 %v1549, %v1550
        %v1552 = vsel %vm1359, %v1492, 0.0
        %v1553 = vadd.f32 %v1551, %v1552
        %v1554 = vsel %vm1359, %v1493, 0.0
        %v1555 = vadd.f32 %v1553, %v1554
        %v1556 = vsel %vm1359, %v1494, 0.0
        %v1557 = vadd.f32 %v1555, %v1556
        %v1558 = vrot.slane %v1557, 4
        %v1559 = vadd.f32 %v1557, %v1558
        %v1560 = vrot.slane %v1559, 2
        %v1561 = vadd.f32 %v1559, %v1560
        %v1562 = vrot.slane %v1561, 1
        %v1563 = vadd.f32 %v1561, %v1562
        %1564 = vst.msk [vmem:[%s206] sm:$0x1] %vm1461, %v1563
        %p1565 = scmp.lt.s32.totalorder %s22, 1
        %s1566 = scalar_select %p1565, %s22, 1
        %s1567 = smul.addr %s1566, 32
        %s1568 = smul.addr %s1567, 8
        %s1569 = scalar_lea.vmem %s2, %s1568
        %s1570 = sand.u32 %s103, 1
        %s1571 = scalar_lea.sflag [#allocation3], %s1570
        %s1572 = sand.u32 %s103, 1
        %s1573 = scalar_lea.vmem [#allocation2], %s1572
        %s1574 = sand.u32 %s129, 1
        %s1575 = scalar_lea.sflag [#allocation5], %s1574
        %s1576 = sand.u32 %s129, 1
        %s1577 = scalar_lea.vmem [#allocation4], %s1576
        // Predicated region
        $region29: #{tpu_custom_call.1} parent=27 // pred_check
          %p1578 = pneg %p87
        $region30: #{tpu_custom_call.1} parent=27 // pred_check_branch
          %1580 = sbr.rel (%p1578) target = $region32
        $region31: #{tpu_custom_call.1} parent=27 // pred_region
          _
        $region32: #{tpu_custom_call.1} parent=27 // pred_fallthru
          _
        // Predicated region
        $region33: #{tpu_custom_call.1} parent=27 // pred_check
          %p1581 = pneg %p113
        $region34: #{tpu_custom_call.1} parent=27 // pred_check_branch
          %1583 = sbr.rel (%p1581) target = $region36
        $region35: #{tpu_custom_call.1} parent=27 // pred_region
          %1585 = vsyncadd %s1571, 0
          %s1586 = scalar_lea.hbm %s3, %s22
          %s1588 = sshll.u32 %s1573, 4
          %s1589 = int_to_ptr.vmem [resolvable:$true] %s1588
          %s1590 = sshll.u32 %s1586, 4
          %s1591 = int_to_ptr.hbm [resolvable:$true] %s1590
          %1593 = dma.vmem_to_hbm [thread:$0]  %s1589, 16, %s1591, %s1571
        $region36: #{tpu_custom_call.1} parent=27 // pred_fallthru
          _
        // Predicated region
        $region37: #{tpu_custom_call.1} parent=27 // pred_check
          %p1594 = pneg %p139
        $region38: #{tpu_custom_call.1} parent=27 // pred_check_branch
          %1596 = sbr.rel (%p1594) target = $region40
        $region39: #{tpu_custom_call.1} parent=27 // pred_region
          %1598 = vsyncadd %s1575, 0
          %s1599 = scalar_lea.hbm %s4, %s22
          %s1601 = sshll.u32 %s1577, 4
          %s1602 = int_to_ptr.vmem [resolvable:$true] %s1601
          %s1603 = sshll.u32 %s1599, 4
          %s1604 = int_to_ptr.hbm [resolvable:$true] %s1603
          %1606 = dma.vmem_to_hbm [thread:$0]  %s1602, 16, %s1604, %s1575
        $region40: #{tpu_custom_call.1} parent=27 // pred_fallthru
          _
      $region28: #{tpu_custom_call.1} parent=5 // pred_fallthru
        _
      %p1607 = scmp.le.s32.totalorder 2, %s17
      // Predicated region
      $region41: #{tpu_custom_call.1} parent=5 // pred_check
        %p1608 = pneg %p1607
      $region42: #{tpu_custom_call.1} parent=5 // pred_check_branch
        %1610 = sbr.rel (%p1608) target = $region44
      $region43: #{tpu_custom_call.1} parent=5 // pred_region
        %s1611 = ssub.s32 %s17, 2
        // Predicated region
        $region45: #{tpu_custom_call.1} parent=43 // pred_check
          %p1612 = pneg %p93
        $region46: #{tpu_custom_call.1} parent=43 // pred_check_branch
          %1614 = sbr.rel (%p1612) target = $region48
        $region47: #{tpu_custom_call.1} parent=43 // pred_region
          %p1615 = scmp.lt.s32.totalorder %s23, 1
          %s1616 = scalar_select %p1615, %s23, 1
          %s1617 = smul.addr %s1616, 32
          %s1618 = smul.addr %s1617, 8
          %s1619 = scalar_lea.vmem %s2, %s1618
        $region48: #{tpu_custom_call.1} parent=43 // pred_fallthru
          _
        // Predicated region
        $region49: #{tpu_custom_call.1} parent=43 // pred_check
          %p1620 = pneg %p119
        $region50: #{tpu_custom_call.1} parent=43 // pred_check_branch
          %1622 = sbr.rel (%p1620) target = $region52
        $region51: #{tpu_custom_call.1} parent=43 // pred_region
          %s1623 = sand.u32 %s104, 1
          %s1624 = scalar_lea.sflag [#allocation3], %s1623
          %s1625 = sand.u32 %s104, 1
          %s1626 = scalar_lea.vmem [#allocation2], %s1625
          %1628 = dma.done %s1624, 16
        $region52: #{tpu_custom_call.1} parent=43 // pred_fallthru
          _
        // Predicated region
        $region53: #{tpu_custom_call.1} parent=43 // pred_check
          %p1629 = pneg %p145
        $region54: #{tpu_custom_call.1} parent=43 // pred_check_branch
          %1631 = sbr.rel (%p1629) target = $region56
        $region55: #{tpu_custom_call.1} parent=43 // pred_region
          %s1632 = sand.u32 %s130, 1
          %s1633 = scalar_lea.sflag [#allocation5], %s1632
          %s1634 = sand.u32 %s130, 1
          %s1635 = scalar_lea.vmem [#allocation4], %s1634
          %1637 = dma.done %s1633, 16
        $region56: #{tpu_custom_call.1} parent=43 // pred_fallthru
          _
      $region44: #{tpu_custom_call.1} parent=5 // pred_fallthru
        _
    $region6: #{tpu_custom_call.1} parent=1 // loop_footer
      %s21 = sadd.s32 1, %s17
    $region7: #{tpu_custom_call.1} parent=1 // loop_footer_branch
      %16 = sbr.rel target = $region3
    $region8: #{tpu_custom_call.1} parent=1 // loop_exit
      _
    %1638 = vsyncpa [#allocation3], 1
    %s1639 = scalar_lea.sflag [#allocation3], 1
    %1640 = vsyncpa %s1639, 1
    %1641 = vsyncpa [#allocation5], 1
    %s1642 = scalar_lea.sflag [#allocation5], 1
    %1643 = vsyncpa %s1642, 1

</llo_original>
